<compile_context>
chip_gen: v7x
topology: tpu7x:2x2x1
jax: 0.10.0
libtpu: 0.0.40
codegen_flags: <defaults>
</compile_context>

<pallas_src>
import functools
import math

import numpy as np
import jax
import jax.numpy as jnp
from jax.experimental import pallas as pl
from jax.experimental.pallas import tpu as pltpu


def _round_up(n, m):
    return (n + m - 1) // m * m


# ----------------------------------------------------------------------------
# Pallas kernel: one fused BasicBlock, one batch-tile of rows per grid step
# ----------------------------------------------------------------------------
def _basic_block_kernel(T, K, dilation, p1, p2, alpha, has_down, cout_p, *refs):
    x_ref, w1_ref, b1_ref, w2_ref, b2_ref, out_ref = refs
    R = x_ref.shape[0]                       # rows in this tile = batches_per_step * T

    # position-within-sequence of each row (hoisted; reused by both convs)
    t_idx = jax.lax.broadcasted_iota(jnp.int32, (R, 1), 0) % T

    def im2col(h, pad):
        """Stack the K dilated taps along lanes -> (R, K*C) bf16, one matmul per conv.

        Rolls + masks run in h's dtype (f32: safe on every generation incl. v5e);
        each tap is cast to bf16 BEFORE the concat so the big column matrix is bf16."""
        pieces = []
        for k in range(K):
            s = k * dilation - pad           # tap offset in time (static)
            if s == 0:
                v = h
            else:
                # roll along sublanes (XLU, ~free) + zero-mask rows whose tap falls
                # outside [0, T); this also makes cross-batch wraparound harmless.
                v = pltpu.roll(h, shift=(-s) % R, axis=0)
                valid = jnp.logical_and(t_idx + s >= 0, t_idx + s < T)
                v = jnp.where(valid, v, jnp.zeros_like(v))
            pieces.append(v.astype(jnp.bfloat16))
        return jnp.concatenate(pieces, axis=1)

    def leaky(v):                            # LeakyReLU(negative_slope=alpha)
        return jnp.maximum(v, alpha * v)

    # conv1 (+ folded bn1) and, when present, the downsample conv (+ folded bn),
    # fused as ONE MXU matmul over the shared im2col columns (N = 2*cout_p).
    cols1 = im2col(x_ref[...].astype(jnp.float32), p1)       # (R, K*cin_p) bf16
    y = jnp.dot(cols1, w1_ref[...], preferred_element_type=jnp.float32) + b1_ref[...]
    if has_down:
        y1, shortcut = y[:, :cout_p], y[:, cout_p:]
    else:
        y1 = y
    h1 = leaky(y1)

    # conv2 (+ folded bn2) — second single MXU matmul, contraction K*cout_p
    cols2 = im2col(h1, p2)                                    # (R, K*cout_p) bf16
    y2 = jnp.dot(cols2, w2_ref[...], preferred_element_type=jnp.float32) + b2_ref[...]

    if not has_down:
        # identity shortcut: cheap re-read at the add site (no long f32 live range)
        shortcut = x_ref[...]

    out_ref[...] = leaky(y2 + shortcut).astype(out_ref.dtype)


# ----------------------------------------------------------------------------
# Plain-JAX glue: BN folding, im2col weight packing, lane padding
# ----------------------------------------------------------------------------
def _fold_bn(w, b, bn, eps):
    # eval-mode BN folded into conv: y = x*W*scale + (b - mean)*scale + beta
    scale = bn["gamma"] / jnp.sqrt(bn["var"] + eps)
    return w * scale[:, None, None], (b - bn["mean"]) * scale + bn["beta"]


def _pack_im2col_weight(w_oik, cin_p, cout_p):
    # torch Conv1d weight (C_out, C_in, K) -> (K*Cin_pad, Cout_pad) im2col matrix (f32)
    c_out, c_in, k = w_oik.shape
    wm = jnp.zeros((k, cin_p, cout_p), jnp.float32)
    wm = wm.at[:, :c_in, :c_out].set(jnp.transpose(w_oik, (2, 1, 0)))
    return wm.reshape(k * cin_p, cout_p)


def _pad_bias(b, cout_p):
    return jnp.zeros((1, cout_p), jnp.float32).at[0, :b.shape[0]].set(b)


def pack_block_params(params, *, ker_size, eps=1e-5):
    """Fold eval-mode BN and pack lane-padded bf16 im2col weights (do this once)."""
    planes, c_in, _ = params["conv1_w"].shape
    has_down = "down_w" in params
    cin_p = _round_up(c_in, 128)
    cout_p = _round_up(planes, 128)
    if not has_down:
        assert c_in == planes, "identity shortcut needs inplanes == planes"
        cin_p = cout_p = max(cin_p, cout_p)

    w1, b1 = _fold_bn(params["conv1_w"], params["conv1_b"], params["bn1"], eps)
    w2, b2 = _fold_bn(params["conv2_w"], params["conv2_b"], params["bn2"], eps)
    w1m, b1m = _pack_im2col_weight(w1, cin_p, cout_p), _pad_bias(b1, cout_p)
    if has_down:
        wd, bd = _fold_bn(params["down_w"], params["down_b"], params["bn_d"], eps)
        # fuse conv1 + downsample along output lanes -> one 2*cout_p-wide MXU matmul
        w1m = jnp.concatenate([w1m, _pack_im2col_weight(wd, cin_p, cout_p)], axis=1)
        b1m = jnp.concatenate([b1m, _pad_bias(bd, cout_p)], axis=1)
    w2m, b2m = _pack_im2col_weight(w2, cout_p, cout_p), _pad_bias(b2, cout_p)

    return dict(w1=w1m.astype(jnp.bfloat16), b1=b1m,
                w2=w2m.astype(jnp.bfloat16), b2=b2m,
                c_in=c_in, planes=planes, cin_p=cin_p, cout_p=cout_p,
                K=ker_size, has_down=has_down)


# ----------------------------------------------------------------------------
# Per-generation VMEM planning & batch-tile selection
# ----------------------------------------------------------------------------
def _tpu_vmem_bytes():
    try:
        return int(pltpu.get_tpu_info().vmem_capacity_bytes)
    except Exception:
        return 64 * 1024 * 1024          # conservative (v7x-sized) fallback


def _vmem_plan(K, cin_p, cout_p, has_down):
    """VMEM limit for this generation and the max rows-per-step that fit in it."""
    vmem_limit = min(96 * 1024 * 1024, _tpu_vmem_bytes() * 3 // 4)  # ~96M v5e/v6e, ~48M v7x
    n1 = 2 * cout_p if has_down else cout_p
    weight_bytes = (K * cin_p * n1 + K * cout_p * cout_p) * 2 + (n1 + cout_p) * 4
    row_bytes = (
        2 * (cin_p + cout_p) * 2         # double-buffered x / out tiles (bf16)
        + K * (cin_p + cout_p) * 2       # cols1 / cols2 (bf16)
        + (cin_p + cout_p) * 4           # transient f32 roll piece + h1
        + (n1 + cout_p) * 4              # f32 matmul results
    )
    max_rows = max(8, (int(vmem_limit * 0.6) - 2 * weight_bytes) // row_bytes)
    return vmem_limit, max_rows


def _pick_batches_per_step(B, T, max_rows):
    """Batches per grid step: ~1-2K sublane-aligned rows per step, >= 2 grid steps
    when possible (so the 'parallel' axis can shard across both v7x TensorCores),
    preferring a divisor of B (otherwise the caller pads B up to a multiple)."""
    m = 8 // math.gcd(T, 8)                         # bt multiple of m -> (bt*T) % 8 == 0
    cap_rows = max(m * T, min(2048, max_rows))
    bt_cap = max(m, (cap_rows // T) // m * m)
    if B >= 2 * m:                                  # keep at least 2 grid steps
        bt_cap = min(bt_cap, max(m, (B // 2) // m * m))
    bt_cap = min(bt_cap, _round_up(B, m))
    for bt in range(bt_cap, 0, -1):                 # largest aligned divisor of B
        if bt % m == 0 and B % bt == 0:
            return bt
    return bt_cap                                    # caller pads B


# ----------------------------------------------------------------------------
# Rows-layout entry point (chained blocks stay in this layout) + NCT wrapper
# ----------------------------------------------------------------------------
def basic_block_rows(x_rows, packed, *, B, T, stride=1, dilation=1,
                     first_dilation=None, negative_slope=0.01):
    """x_rows: (B*T, cin_p) bf16 lane-padded channels-last rows.
    Returns (B*T, cout_p) bf16 rows (feed directly into the next block)."""
    if stride != 1:
        raise NotImplementedError("stride > 1 not implemented")  # TODO(synk)
    K, d = packed["K"], dilation
    fd = d if first_dilation is None else first_dilation
    p1, p2 = fd, K // 2
    # residual add requires length-preserving convs (as in the module's usable configs)
    assert 2 * p1 == d * (K - 1), "conv1 must preserve sequence length"
    assert 2 * p2 == d * (K - 1), "conv2 must preserve sequence length (needs dilation==1)"

    cin_p, cout_p, has_down = packed["cin_p"], packed["cout_p"], packed["has_down"]
    assert x_rows.shape == (B * T, cin_p) and x_rows.dtype == jnp.bfloat16

    vmem_limit, max_rows = _vmem_plan(K, cin_p, cout_p, has_down)
    bt = _pick_batches_per_step(B, T, max_rows)
    B_pad = -(-B // bt) * bt
    if B_pad != B:                                   # pad batch so the grid divides evenly
        x_rows = jnp.pad(x_rows, ((0, (B_pad - B) * T), (0, 0)))
    R, grid = bt * T, (B_pad // bt,)
    n1 = 2 * cout_p if has_down else cout_p

    kernel = functools.partial(_basic_block_kernel, T, K, d, p1, p2,
                               float(negative_slope), has_down, cout_p)

    def run(single_buffer_weights):
        def const_spec(shape):
            # grid-invariant operands: single buffer saves VMEM (default is double)
            if single_buffer_weights:
                return pl.BlockSpec(shape, lambda g: (0, 0), pipeline_mode=pl.Buffered(1))
            return pl.BlockSpec(shape, lambda g: (0, 0))

        return pl.pallas_call(
            kernel,
            out_shape=jax.ShapeDtypeStruct((B_pad * T, cout_p), jnp.bfloat16),
            grid=grid,
            in_specs=[
                pl.BlockSpec((R, cin_p), lambda g: (g, 0)),
                const_spec((K * cin_p, n1)),
                const_spec((1, n1)),
                const_spec((K * cout_p, cout_p)),
                const_spec((1, cout_p)),
            ],
            out_specs=pl.BlockSpec((R, cout_p), lambda g: (g, 0)),
            compiler_params=pltpu.CompilerParams(
                dimension_semantics=("parallel",),
                vmem_limit_bytes=int(vmem_limit),
            ),
        )(x_rows, packed["w1"], packed["b1"], packed["w2"], packed["b2"])

    try:
        out = run(True)
    except Exception:            # older JAX without BlockSpec pipeline_mode support
        out = run(False)

    return out[:B * T] if B_pad != B else out


def basic_block_forward(x_nct, params, *, ker_size, stride=1, dilation=1,
                        first_dilation=None, negative_slope=0.01, eps=1e-5):
    """x_nct: (B, C_in, T) PyTorch layout; returns (B, planes, T) in x's dtype."""
    B, c_in, T = x_nct.shape
    packed = pack_block_params(params, ker_size=ker_size, eps=eps)
    assert packed["c_in"] == c_in

    # (B, C, T) -> lane-padded bf16 rows (B*T, cin_p).  When chaining BasicBlocks,
    # stay in the rows layout (basic_block_rows) and skip this + the inverse
    # transpose entirely — they are pure layout plumbing.
    x_rows = jnp.pad(jnp.transpose(x_nct, (0, 2, 1)).reshape(B * T, c_in),
                     ((0, 0), (0, packed["cin_p"] - c_in))).astype(jnp.bfloat16)

    out_rows = basic_block_rows(x_rows, packed, B=B, T=T, stride=stride,
                                dilation=dilation, first_dilation=first_dilation,
                                negative_slope=negative_slope)

    out = out_rows[:, :packed["planes"]].reshape(B, T, packed["planes"])
    return jnp.transpose(out, (0, 2, 1)).astype(x_nct.dtype)


# ----------------------------------------------------------------------------
# Pure-JAX (f32) reference mirroring the PyTorch module in eval mode
# ----------------------------------------------------------------------------
def ref_basic_block(x_nct, params, *, ker_size, stride=1, dilation=1,
                    first_dilation=None, negative_slope=0.01, eps=1e-5):
    d = dilation
    fd = d if first_dilation is None else first_dilation

    def conv(z, w, b, pad):
        y = jax.lax.conv_general_dilated(
            z, w, window_strides=(stride,), padding=[(pad, pad)],
            rhs_dilation=(d,), dimension_numbers=("NCH", "OIH", "NCH"))
        return y + b[None, :, None]

    def bn(z, p):
        scale = p["gamma"] / jnp.sqrt(p["var"] + eps)
        return (z - p["mean"][None, :, None]) * scale[None, :, None] + p["beta"][None, :, None]

    def act(z):
        return jnp.maximum(z, negative_slope * z)

    h = act(bn(conv(x_nct, params["conv1_w"], params["conv1_b"], fd), params["bn1"]))
    h = bn(conv(h, params["conv2_w"], params["conv2_b"], ker_size // 2), params["bn2"])
    if "down_w" in params:
        sc = bn(conv(x_nct, params["down_w"], params["down_b"], fd), params["bn_d"])
    else:
        sc = x_nct
    return act(h + sc)


# ----------------------------------------------------------------------------
# Deterministic synthetic parameters (mirrors module __init__ shapes, eval-mode BN)
# ----------------------------------------------------------------------------
def init_params(key, inplanes, planes, ker_size, with_downsample):
    def conv_init(k, c_out, c_in, ksz):
        kw, kb = jax.random.split(k)
        bnd = 1.0 / np.sqrt(c_in * ksz)
        w = jax.random.uniform(kw, (c_out, c_in, ksz), jnp.float32, -bnd, bnd)
        b = jax.random.uniform(kb, (c_out,), jnp.float32, -bnd, bnd)
        return w, b

    def bn_init(k, c):
        k1, k2, k3, k4 = jax.random.split(k, 4)
        return {"gamma": jax.random.uniform(k1, (c,), jnp.float32, 0.8, 1.2),
                "beta": 0.1 * jax.random.normal(k2, (c,), jnp.float32),
                "mean": 0.1 * jax.random.normal(k3, (c,), jnp.float32),
                "var": jax.random.uniform(k4, (c,), jnp.float32, 0.8, 1.2)}

    keys = jax.random.split(key, 6)
    w1, b1 = conv_init(keys[0], planes, inplanes, ker_size)
    w2, b2 = conv_init(keys[1], planes, planes, ker_size)
    prm = {"conv1_w": w1, "conv1_b": b1, "bn1": bn_init(keys[2], planes),
           "conv2_w": w2, "conv2_b": b2, "bn2": bn_init(keys[3], planes)}
    if with_downsample:
        wd, bd = conv_init(keys[4], planes, inplanes, ker_size)
        prm["down_w"], prm["down_b"], prm["bn_d"] = wd, bd, bn_init(keys[5], planes)
    return prm


# ----------------------------------------------------------------------------
if __name__ == "__main__":
    B, T, K = 2, 16, 3
    key = jax.random.PRNGKey(0)
    kx1, kp1, kx2, kp2 = jax.random.split(key, 4)

    # case 1: channel change -> downsample branch (Conv1d + BN shortcut), fused matmul
    x1 = jax.random.normal(kx1, (B, 8, T), jnp.float32)
    prm1 = init_params(kp1, 8, 16, K, with_downsample=True)
    out1 = jax.block_until_ready(basic_block_forward(x1, prm1, ker_size=K))
    ref1 = ref_basic_block(x1, prm1, ker_size=K)
    assert out1.shape == (B, 16, T), out1.shape
    np.testing.assert_allclose(np.asarray(out1), np.asarray(ref1), rtol=2e-2, atol=2e-2)

    # case 2: identity shortcut (inplanes == planes)
    x2 = jax.random.normal(kx2, (B, 16, T), jnp.float32)
    prm2 = init_params(kp2, 16, 16, K, with_downsample=False)
    out2 = jax.block_until_ready(basic_block_forward(x2, prm2, ker_size=K))
    ref2 = ref_basic_block(x2, prm2, ker_size=K)
    assert out2.shape == (B, 16, T), out2.shape
    np.testing.assert_allclose(np.asarray(out2), np.asarray(ref2), rtol=2e-2, atol=2e-2)

    print("KERNEL_OK")
</pallas_src>

<mosaic_0001>
module attributes {stable_mosaic.version = 11 : i64} {
  func.func @_basic_block_kernel(%arg0: i32, %arg1: memref<16x128xbf16, #tpu.memory_space<vmem>>, %arg2: memref<384x256xbf16, #tpu.memory_space<vmem>>, %arg3: memref<1x256xf32, #tpu.memory_space<vmem>>, %arg4: memref<384x128xbf16, #tpu.memory_space<vmem>>, %arg5: memref<1x128xf32, #tpu.memory_space<vmem>>, %arg6: memref<16x128xbf16, #tpu.memory_space<vmem>>) attributes {dimension_semantics = [#tpu.dimension_semantics<parallel>], iteration_bounds = array<i64: 2>, scalar_prefetch = 0 : i64, scratch_operands = 0 : i64, tpu.core_type = #tpu.core_type<tc>, window_params = [{transform_indices = @transform_0, window_bounds = array<i64: 16, 128>}, {pipeline_mode = #tpu.pipeline_mode<synchronous>, transform_indices = @transform_1, window_bounds = array<i64: 384, 256>}, {pipeline_mode = #tpu.pipeline_mode<synchronous>, transform_indices = @transform_2, window_bounds = array<i64: 1, 256>}, {pipeline_mode = #tpu.pipeline_mode<synchronous>, transform_indices = @transform_3, window_bounds = array<i64: 384, 128>}, {pipeline_mode = #tpu.pipeline_mode<synchronous>, transform_indices = @transform_4, window_bounds = array<i64: 1, 128>}, {transform_indices = @transform_5, window_bounds = array<i64: 16, 128>}]} {
    %0 = tpu.iota {dimensions = array<i32: 0>} : vector<16x1xi32>
    %c16_i32 = arith.constant 16 : i32
    %c0_i32 = arith.constant 0 : i32
    %1 = arith.cmpi eq, %c16_i32, %c0_i32 : i32
    %c1_i32 = arith.constant 1 : i32
    %2 = arith.select %1, %c1_i32, %c16_i32 : i32
    %3 = vector.broadcast %2 : i32 to vector<16x1xi32>
    %4 = arith.remsi %0, %3 : vector<16x1xi32>
    %c0_i32_0 = arith.constant 0 : i32
    %5 = vector.broadcast %c0_i32_0 : i32 to vector<16x1xi32>
    %6 = arith.cmpi ne, %4, %5 : vector<16x1xi32>
    %c0_i32_1 = arith.constant 0 : i32
    %7 = vector.broadcast %c0_i32_1 : i32 to vector<16x1xi32>
    %8 = arith.cmpi slt, %4, %7 : vector<16x1xi32>
    %c0_i32_2 = arith.constant 0 : i32
    %9 = arith.cmpi slt, %2, %c0_i32_2 : i32
    %10 = vector.broadcast %9 : i1 to vector<16x1xi1>
    %11 = vector.broadcast %10 : vector<16x1xi1> to vector<16x1xi1>
    %12 = arith.xori %8, %11 : vector<16x1xi1>
    %13 = arith.andi %12, %6 : vector<16x1xi1>
    %14 = vector.broadcast %2 : i32 to vector<16x1xi32>
    %15 = arith.addi %4, %14 : vector<16x1xi32>
    %16 = arith.select %13, %15, %4 : vector<16x1xi1>, vector<16x1xi32>
    %c0 = arith.constant 0 : index
    %c0_3 = arith.constant 0 : index
    %17 = vector.load %arg1[%c0, %c0_3] : memref<16x128xbf16, #tpu.memory_space<vmem>>, vector<16x128xbf16>
    %18 = arith.extf %17 : vector<16x128xbf16> to vector<16x128xf32>
    %c1_i32_4 = arith.constant 1 : i32
    %19 = tpu.dynamic_rotate %18 by %c1_i32_4 dim 0 : vector<16x128xf32>, i32 -> vector<16x128xf32>
    %c-1_i32 = arith.constant -1 : i32
    %20 = vector.broadcast %c-1_i32 : i32 to vector<16x1xi32>
    %21 = arith.addi %16, %20 : vector<16x1xi32>
    %c0_i32_5 = arith.constant 0 : i32
    %22 = vector.broadcast %c0_i32_5 : i32 to vector<16x1xi32>
    %23 = arith.cmpi sge, %21, %22 : vector<16x1xi32>
    %c-1_i32_6 = arith.constant -1 : i32
    %24 = vector.broadcast %c-1_i32_6 : i32 to vector<16x1xi32>
    %25 = arith.addi %16, %24 : vector<16x1xi32>
    %c16_i32_7 = arith.constant 16 : i32
    %26 = vector.broadcast %c16_i32_7 : i32 to vector<16x1xi32>
    %27 = arith.cmpi slt, %25, %26 : vector<16x1xi32>
    %28 = arith.andi %23, %27 : vector<16x1xi1>
    %cst = arith.constant 0.000000e+00 : f32
    %29 = vector.broadcast %cst : f32 to vector<16x128xf32>
    %30 = vector.shape_cast %28 : vector<16x1xi1> to vector<16x1xi1>
    %31 = vector.broadcast %30 : vector<16x1xi1> to vector<16x128xi1>
    %32 = arith.select %31, %19, %29 : vector<16x128xi1>, vector<16x128xf32>
    %33 = arith.truncf %32 : vector<16x128xf32> to vector<16x128xbf16>
    %34 = arith.truncf %18 : vector<16x128xf32> to vector<16x128xbf16>
    %c15_i32 = arith.constant 15 : i32
    %35 = tpu.dynamic_rotate %18 by %c15_i32 dim 0 : vector<16x128xf32>, i32 -> vector<16x128xf32>
    %c1_i32_8 = arith.constant 1 : i32
    %36 = vector.broadcast %c1_i32_8 : i32 to vector<16x1xi32>
    %37 = arith.addi %16, %36 : vector<16x1xi32>
    %c0_i32_9 = arith.constant 0 : i32
    %38 = vector.broadcast %c0_i32_9 : i32 to vector<16x1xi32>
    %39 = arith.cmpi sge, %37, %38 : vector<16x1xi32>
    %c1_i32_10 = arith.constant 1 : i32
    %40 = vector.broadcast %c1_i32_10 : i32 to vector<16x1xi32>
    %41 = arith.addi %16, %40 : vector<16x1xi32>
    %c16_i32_11 = arith.constant 16 : i32
    %42 = vector.broadcast %c16_i32_11 : i32 to vector<16x1xi32>
    %43 = arith.cmpi slt, %41, %42 : vector<16x1xi32>
    %44 = arith.andi %39, %43 : vector<16x1xi1>
    %cst_12 = arith.constant 0.000000e+00 : f32
    %45 = vector.broadcast %cst_12 : f32 to vector<16x128xf32>
    %46 = vector.shape_cast %44 : vector<16x1xi1> to vector<16x1xi1>
    %47 = vector.broadcast %46 : vector<16x1xi1> to vector<16x128xi1>
    %48 = arith.select %47, %35, %45 : vector<16x128xi1>, vector<16x128xf32>
    %49 = arith.truncf %48 : vector<16x128xf32> to vector<16x128xbf16>
    %50 = tpu.concatenate %33, %34, %49 in 1 : vector<16x128xbf16>, vector<16x128xbf16>, vector<16x128xbf16> -> vector<16x384xbf16>
    %c0_13 = arith.constant 0 : index
    %c0_14 = arith.constant 0 : index
    %51 = vector.load %arg2[%c0_13, %c0_14] : memref<384x256xbf16, #tpu.memory_space<vmem>>, vector<384x256xbf16>
    %cst_15 = arith.constant dense<0.000000e+00> : vector<16x256xf32>
    %52 = tpu.matmul %50, %51, %cst_15 {dimension_numbers = #tpu.dot_dimension_numbers<[1], [0], [0], [1], [0, 0, 1, 1], [], []>} : vector<16x384xbf16>, vector<384x256xbf16>, vector<16x256xf32> -> vector<16x256xf32>
    %c0_16 = arith.constant 0 : index
    %c0_17 = arith.constant 0 : index
    %53 = vector.load %arg3[%c0_16, %c0_17] : memref<1x256xf32, #tpu.memory_space<vmem>>, vector<1x256xf32>
    %54 = vector.broadcast %53 : vector<1x256xf32> to vector<16x256xf32>
    %55 = arith.addf %52, %54 : vector<16x256xf32>
    %56 = vector.extract_strided_slice %55 {offsets = [0, 0], sizes = [16, 128], strides = [1, 1]} : vector<16x256xf32> to vector<16x128xf32>
    %57 = vector.extract_strided_slice %55 {offsets = [0, 128], sizes = [16, 128], strides = [1, 1]} : vector<16x256xf32> to vector<16x128xf32>
    %cst_18 = arith.constant 0.00999999977 : f32
    %58 = vector.broadcast %cst_18 : f32 to vector<16x128xf32>
    %59 = arith.mulf %58, %56 : vector<16x128xf32>
    %60 = arith.maximumf %56, %59 : vector<16x128xf32>
    %c1_i32_19 = arith.constant 1 : i32
    %61 = tpu.dynamic_rotate %60 by %c1_i32_19 dim 0 : vector<16x128xf32>, i32 -> vector<16x128xf32>
    %c-1_i32_20 = arith.constant -1 : i32
    %62 = vector.broadcast %c-1_i32_20 : i32 to vector<16x1xi32>
    %63 = arith.addi %16, %62 : vector<16x1xi32>
    %c0_i32_21 = arith.constant 0 : i32
    %64 = vector.broadcast %c0_i32_21 : i32 to vector<16x1xi32>
    %65 = arith.cmpi sge, %63, %64 : vector<16x1xi32>
    %c-1_i32_22 = arith.constant -1 : i32
    %66 = vector.broadcast %c-1_i32_22 : i32 to vector<16x1xi32>
    %67 = arith.addi %16, %66 : vector<16x1xi32>
    %c16_i32_23 = arith.constant 16 : i32
    %68 = vector.broadcast %c16_i32_23 : i32 to vector<16x1xi32>
    %69 = arith.cmpi slt, %67, %68 : vector<16x1xi32>
    %70 = arith.andi %65, %69 : vector<16x1xi1>
    %cst_24 = arith.constant 0.000000e+00 : f32
    %71 = vector.broadcast %cst_24 : f32 to vector<16x128xf32>
    %72 = vector.shape_cast %70 : vector<16x1xi1> to vector<16x1xi1>
    %73 = vector.broadcast %72 : vector<16x1xi1> to vector<16x128xi1>
    %74 = arith.select %73, %61, %71 : vector<16x128xi1>, vector<16x128xf32>
    %75 = arith.truncf %74 : vector<16x128xf32> to vector<16x128xbf16>
    %76 = arith.truncf %60 : vector<16x128xf32> to vector<16x128xbf16>
    %c15_i32_25 = arith.constant 15 : i32
    %77 = tpu.dynamic_rotate %60 by %c15_i32_25 dim 0 : vector<16x128xf32>, i32 -> vector<16x128xf32>
    %c1_i32_26 = arith.constant 1 : i32
    %78 = vector.broadcast %c1_i32_26 : i32 to vector<16x1xi32>
    %79 = arith.addi %16, %78 : vector<16x1xi32>
    %c0_i32_27 = arith.constant 0 : i32
    %80 = vector.broadcast %c0_i32_27 : i32 to vector<16x1xi32>
    %81 = arith.cmpi sge, %79, %80 : vector<16x1xi32>
    %c1_i32_28 = arith.constant 1 : i32
    %82 = vector.broadcast %c1_i32_28 : i32 to vector<16x1xi32>
    %83 = arith.addi %16, %82 : vector<16x1xi32>
    %c16_i32_29 = arith.constant 16 : i32
    %84 = vector.broadcast %c16_i32_29 : i32 to vector<16x1xi32>
    %85 = arith.cmpi slt, %83, %84 : vector<16x1xi32>
    %86 = arith.andi %81, %85 : vector<16x1xi1>
    %cst_30 = arith.constant 0.000000e+00 : f32
    %87 = vector.broadcast %cst_30 : f32 to vector<16x128xf32>
    %88 = vector.shape_cast %86 : vector<16x1xi1> to vector<16x1xi1>
    %89 = vector.broadcast %88 : vector<16x1xi1> to vector<16x128xi1>
    %90 = arith.select %89, %77, %87 : vector<16x128xi1>, vector<16x128xf32>
    %91 = arith.truncf %90 : vector<16x128xf32> to vector<16x128xbf16>
    %92 = tpu.concatenate %75, %76, %91 in 1 : vector<16x128xbf16>, vector<16x128xbf16>, vector<16x128xbf16> -> vector<16x384xbf16>
    %c0_31 = arith.constant 0 : index
    %c0_32 = arith.constant 0 : index
    %93 = vector.load %arg4[%c0_31, %c0_32] : memref<384x128xbf16, #tpu.memory_space<vmem>>, vector<384x128xbf16>
    %cst_33 = arith.constant dense<0.000000e+00> : vector<16x128xf32>
    %94 = tpu.matmul %92, %93, %cst_33 {dimension_numbers = #tpu.dot_dimension_numbers<[1], [0], [0], [1], [0, 0, 1, 1], [], []>} : vector<16x384xbf16>, vector<384x128xbf16>, vector<16x128xf32> -> vector<16x128xf32>
    %c0_34 = arith.constant 0 : index
    %c0_35 = arith.constant 0 : index
    %95 = vector.load %arg5[%c0_34, %c0_35] : memref<1x128xf32, #tpu.memory_space<vmem>>, vector<1x128xf32>
    %96 = vector.broadcast %95 : vector<1x128xf32> to vector<16x128xf32>
    %97 = arith.addf %94, %96 : vector<16x128xf32>
    %98 = arith.addf %97, %57 : vector<16x128xf32>
    %cst_36 = arith.constant 0.00999999977 : f32
    %99 = vector.broadcast %cst_36 : f32 to vector<16x128xf32>
    %100 = arith.mulf %99, %98 : vector<16x128xf32>
    %101 = arith.maximumf %98, %100 : vector<16x128xf32>
    %102 = arith.truncf %101 : vector<16x128xf32> to vector<16x128xbf16>
    %c0_37 = arith.constant 0 : index
    %c0_38 = arith.constant 0 : index
    %103 = vector.load %arg6[%c0_37, %c0_38] : memref<16x128xbf16, #tpu.memory_space<vmem>>, vector<16x128xbf16>
    tpu.vector_store %arg6[%c0_37, %c0_38], %102 {strides = array<i32>} : memref<16x128xbf16, #tpu.memory_space<vmem>>, vector<16x128xbf16>,
    return
  }
  func.func @transform_0(%arg0: i32) -> (i32, i32) {
    %c0_i32 = arith.constant 0 : i32
    %c0_i32_0 = arith.constant 0 : i32
    return %arg0, %c0_i32 : i32, i32
  }
  func.func @transform_1(%arg0: i32) -> (i32, i32) {
    %c0_i32 = arith.constant 0 : i32
    %c0_i32_0 = arith.constant 0 : i32
    %c0_i32_1 = arith.constant 0 : i32
    return %c0_i32, %c0_i32_0 : i32, i32
  }
  func.func @transform_2(%arg0: i32) -> (i32, i32) {
    %c0_i32 = arith.constant 0 : i32
    %c0_i32_0 = arith.constant 0 : i32
    %c0_i32_1 = arith.constant 0 : i32
    return %c0_i32, %c0_i32_0 : i32, i32
  }
  func.func @transform_3(%arg0: i32) -> (i32, i32) {
    %c0_i32 = arith.constant 0 : i32
    %c0_i32_0 = arith.constant 0 : i32
    %c0_i32_1 = arith.constant 0 : i32
    return %c0_i32, %c0_i32_0 : i32, i32
  }
  func.func @transform_4(%arg0: i32) -> (i32, i32) {
    %c0_i32 = arith.constant 0 : i32
    %c0_i32_0 = arith.constant 0 : i32
    %c0_i32_1 = arith.constant 0 : i32
    return %c0_i32, %c0_i32_0 : i32, i32
  }
  func.func @transform_5(%arg0: i32) -> (i32, i32) {
    %c0_i32 = arith.constant 0 : i32
    %c0_i32_0 = arith.constant 0 : i32
    return %arg0, %c0_i32 : i32, i32
  }
}

module attributes {stable_mosaic.version = 11 : i64} {
  func.func @_basic_block_kernel(%arg0: i32, %arg1: memref<16x128xbf16, #tpu.memory_space<vmem>>, %arg2: memref<384x256xbf16, #tpu.memory_space<vmem>>, %arg3: memref<1x256xf32, #tpu.memory_space<vmem>>, %arg4: memref<384x128xbf16, #tpu.memory_space<vmem>>, %arg5: memref<1x128xf32, #tpu.memory_space<vmem>>, %arg6: memref<16x128xbf16, #tpu.memory_space<vmem>>) attributes {dimension_semantics = [#tpu.dimension_semantics<parallel>], iteration_bounds = array<i64: 2>, scalar_prefetch = 0 : i64, scratch_operands = 0 : i64, tpu.core_type = #tpu.core_type<tc>, window_params = [{transform_indices = @transform_0, window_bounds = array<i64: 16, 128>}, {pipeline_mode = #tpu.pipeline_mode<synchronous>, transform_indices = @transform_1, window_bounds = array<i64: 384, 256>}, {pipeline_mode = #tpu.pipeline_mode<synchronous>, transform_indices = @transform_2, window_bounds = array<i64: 1, 256>}, {pipeline_mode = #tpu.pipeline_mode<synchronous>, transform_indices = @transform_3, window_bounds = array<i64: 384, 128>}, {pipeline_mode = #tpu.pipeline_mode<synchronous>, transform_indices = @transform_4, window_bounds = array<i64: 1, 128>}, {transform_indices = @transform_5, window_bounds = array<i64: 16, 128>}]} {
    %0 = tpu.iota {dimensions = array<i32: 0>} : vector<16x1xi32>
    %c16_i32 = arith.constant 16 : i32
    %c0_i32 = arith.constant 0 : i32
    %1 = arith.cmpi eq, %c16_i32, %c0_i32 : i32
    %c1_i32 = arith.constant 1 : i32
    %2 = arith.select %1, %c1_i32, %c16_i32 : i32
    %3 = vector.broadcast %2 : i32 to vector<16x1xi32>
    %4 = arith.remsi %0, %3 : vector<16x1xi32>
    %c0_i32_0 = arith.constant 0 : i32
    %5 = vector.broadcast %c0_i32_0 : i32 to vector<16x1xi32>
    %6 = arith.cmpi ne, %4, %5 : vector<16x1xi32>
    %c0_i32_1 = arith.constant 0 : i32
    %7 = vector.broadcast %c0_i32_1 : i32 to vector<16x1xi32>
    %8 = arith.cmpi slt, %4, %7 : vector<16x1xi32>
    %c0_i32_2 = arith.constant 0 : i32
    %9 = arith.cmpi slt, %2, %c0_i32_2 : i32
    %10 = vector.broadcast %9 : i1 to vector<16x1xi1>
    %11 = vector.broadcast %10 : vector<16x1xi1> to vector<16x1xi1>
    %12 = arith.xori %8, %11 : vector<16x1xi1>
    %13 = arith.andi %12, %6 : vector<16x1xi1>
    %14 = vector.broadcast %2 : i32 to vector<16x1xi32>
    %15 = arith.addi %4, %14 : vector<16x1xi32>
    %16 = arith.select %13, %15, %4 : vector<16x1xi1>, vector<16x1xi32>
    %c0 = arith.constant 0 : index
    %c0_3 = arith.constant 0 : index
    %17 = vector.load %arg1[%c0, %c0_3] : memref<16x128xbf16, #tpu.memory_space<vmem>>, vector<16x128xbf16>
    %18 = arith.extf %17 : vector<16x128xbf16> to vector<16x128xf32>
    %c1_i32_4 = arith.constant 1 : i32
    %19 = tpu.dynamic_rotate %18 by %c1_i32_4 dim 0 : vector<16x128xf32>, i32 -> vector<16x128xf32>
    %c-1_i32 = arith.constant -1 : i32
    %20 = vector.broadcast %c-1_i32 : i32 to vector<16x1xi32>
    %21 = arith.addi %16, %20 : vector<16x1xi32>
    %c0_i32_5 = arith.constant 0 : i32
    %22 = vector.broadcast %c0_i32_5 : i32 to vector<16x1xi32>
    %23 = arith.cmpi sge, %21, %22 : vector<16x1xi32>
    %c-1_i32_6 = arith.constant -1 : i32
    %24 = vector.broadcast %c-1_i32_6 : i32 to vector<16x1xi32>
    %25 = arith.addi %16, %24 : vector<16x1xi32>
    %c16_i32_7 = arith.constant 16 : i32
    %26 = vector.broadcast %c16_i32_7 : i32 to vector<16x1xi32>
    %27 = arith.cmpi slt, %25, %26 : vector<16x1xi32>
    %28 = arith.andi %23, %27 : vector<16x1xi1>
    %cst = arith.constant 0.000000e+00 : f32
    %29 = vector.broadcast %cst : f32 to vector<16x128xf32>
    %30 = vector.shape_cast %28 : vector<16x1xi1> to vector<16x1xi1>
    %31 = vector.broadcast %30 : vector<16x1xi1> to vector<16x128xi1>
    %32 = arith.select %31, %19, %29 : vector<16x128xi1>, vector<16x128xf32>
    %33 = arith.truncf %32 : vector<16x128xf32> to vector<16x128xbf16>
    %34 = arith.truncf %18 : vector<16x128xf32> to vector<16x128xbf16>
    %c15_i32 = arith.constant 15 : i32
    %35 = tpu.dynamic_rotate %18 by %c15_i32 dim 0 : vector<16x128xf32>, i32 -> vector<16x128xf32>
    %c1_i32_8 = arith.constant 1 : i32
    %36 = vector.broadcast %c1_i32_8 : i32 to vector<16x1xi32>
    %37 = arith.addi %16, %36 : vector<16x1xi32>
    %c0_i32_9 = arith.constant 0 : i32
    %38 = vector.broadcast %c0_i32_9 : i32 to vector<16x1xi32>
    %39 = arith.cmpi sge, %37, %38 : vector<16x1xi32>
    %c1_i32_10 = arith.constant 1 : i32
    %40 = vector.broadcast %c1_i32_10 : i32 to vector<16x1xi32>
    %41 = arith.addi %16, %40 : vector<16x1xi32>
    %c16_i32_11 = arith.constant 16 : i32
    %42 = vector.broadcast %c16_i32_11 : i32 to vector<16x1xi32>
    %43 = arith.cmpi slt, %41, %42 : vector<16x1xi32>
    %44 = arith.andi %39, %43 : vector<16x1xi1>
    %cst_12 = arith.constant 0.000000e+00 : f32
    %45 = vector.broadcast %cst_12 : f32 to vector<16x128xf32>
    %46 = vector.shape_cast %44 : vector<16x1xi1> to vector<16x1xi1>
    %47 = vector.broadcast %46 : vector<16x1xi1> to vector<16x128xi1>
    %48 = arith.select %47, %35, %45 : vector<16x128xi1>, vector<16x128xf32>
    %49 = arith.truncf %48 : vector<16x128xf32> to vector<16x128xbf16>
    %50 = tpu.concatenate %33, %34, %49 in 1 : vector<16x128xbf16>, vector<16x128xbf16>, vector<16x128xbf16> -> vector<16x384xbf16>
    %c0_13 = arith.constant 0 : index
    %c0_14 = arith.constant 0 : index
    %51 = vector.load %arg2[%c0_13, %c0_14] : memref<384x256xbf16, #tpu.memory_space<vmem>>, vector<384x256xbf16>
    %cst_15 = arith.constant dense<0.000000e+00> : vector<16x256xf32>
    %52 = tpu.matmul %50, %51, %cst_15 {dimension_numbers = #tpu.dot_dimension_numbers<[1], [0], [0], [1], [0, 0, 1, 1], [], []>} : vector<16x384xbf16>, vector<384x256xbf16>, vector<16x256xf32> -> vector<16x256xf32>
    %c0_16 = arith.constant 0 : index
    %c0_17 = arith.constant 0 : index
    %53 = vector.load %arg3[%c0_16, %c0_17] : memref<1x256xf32, #tpu.memory_space<vmem>>, vector<1x256xf32>
    %54 = vector.broadcast %53 : vector<1x256xf32> to vector<16x256xf32>
    %55 = arith.addf %52, %54 : vector<16x256xf32>
    %56 = vector.extract_strided_slice %55 {offsets = [0, 0], sizes = [16, 128], strides = [1, 1]} : vector<16x256xf32> to vector<16x128xf32>
    %57 = vector.extract_strided_slice %55 {offsets = [0, 128], sizes = [16, 128], strides = [1, 1]} : vector<16x256xf32> to vector<16x128xf32>
    %cst_18 = arith.constant 0.00999999977 : f32
    %58 = vector.broadcast %cst_18 : f32 to vector<16x128xf32>
    %59 = arith.mulf %58, %56 : vector<16x128xf32>
    %60 = arith.maximumf %56, %59 : vector<16x128xf32>
    %c1_i32_19 = arith.constant 1 : i32
    %61 = tpu.dynamic_rotate %60 by %c1_i32_19 dim 0 : vector<16x128xf32>, i32 -> vector<16x128xf32>
    %c-1_i32_20 = arith.constant -1 : i32
    %62 = vector.broadcast %c-1_i32_20 : i32 to vector<16x1xi32>
    %63 = arith.addi %16, %62 : vector<16x1xi32>
    %c0_i32_21 = arith.constant 0 : i32
    %64 = vector.broadcast %c0_i32_21 : i32 to vector<16x1xi32>
    %65 = arith.cmpi sge, %63, %64 : vector<16x1xi32>
    %c-1_i32_22 = arith.constant -1 : i32
    %66 = vector.broadcast %c-1_i32_22 : i32 to vector<16x1xi32>
    %67 = arith.addi %16, %66 : vector<16x1xi32>
    %c16_i32_23 = arith.constant 16 : i32
    %68 = vector.broadcast %c16_i32_23 : i32 to vector<16x1xi32>
    %69 = arith.cmpi slt, %67, %68 : vector<16x1xi32>
    %70 = arith.andi %65, %69 : vector<16x1xi1>
    %cst_24 = arith.constant 0.000000e+00 : f32
    %71 = vector.broadcast %cst_24 : f32 to vector<16x128xf32>
    %72 = vector.shape_cast %70 : vector<16x1xi1> to vector<16x1xi1>
    %73 = vector.broadcast %72 : vector<16x1xi1> to vector<16x128xi1>
    %74 = arith.select %73, %61, %71 : vector<16x128xi1>, vector<16x128xf32>
    %75 = arith.truncf %74 : vector<16x128xf32> to vector<16x128xbf16>
    %76 = arith.truncf %60 : vector<16x128xf32> to vector<16x128xbf16>
    %c15_i32_25 = arith.constant 15 : i32
    %77 = tpu.dynamic_rotate %60 by %c15_i32_25 dim 0 : vector<16x128xf32>, i32 -> vector<16x128xf32>
    %c1_i32_26 = arith.constant 1 : i32
    %78 = vector.broadcast %c1_i32_26 : i32 to vector<16x1xi32>
    %79 = arith.addi %16, %78 : vector<16x1xi32>
    %c0_i32_27 = arith.constant 0 : i32
    %80 = vector.broadcast %c0_i32_27 : i32 to vector<16x1xi32>
    %81 = arith.cmpi sge, %79, %80 : vector<16x1xi32>
    %c1_i32_28 = arith.constant 1 : i32
    %82 = vector.broadcast %c1_i32_28 : i32 to vector<16x1xi32>
    %83 = arith.addi %16, %82 : vector<16x1xi32>
    %c16_i32_29 = arith.constant 16 : i32
    %84 = vector.broadcast %c16_i32_29 : i32 to vector<16x1xi32>
    %85 = arith.cmpi slt, %83, %84 : vector<16x1xi32>
    %86 = arith.andi %81, %85 : vector<16x1xi1>
    %cst_30 = arith.constant 0.000000e+00 : f32
    %87 = vector.broadcast %cst_30 : f32 to vector<16x128xf32>
    %88 = vector.shape_cast %86 : vector<16x1xi1> to vector<16x1xi1>
    %89 = vector.broadcast %88 : vector<16x1xi1> to vector<16x128xi1>
    %90 = arith.select %89, %77, %87 : vector<16x128xi1>, vector<16x128xf32>
    %91 = arith.truncf %90 : vector<16x128xf32> to vector<16x128xbf16>
    %92 = tpu.concatenate %75, %76, %91 in 1 : vector<16x128xbf16>, vector<16x128xbf16>, vector<16x128xbf16> -> vector<16x384xbf16>
    %c0_31 = arith.constant 0 : index
    %c0_32 = arith.constant 0 : index
    %93 = vector.load %arg4[%c0_31, %c0_32] : memref<384x128xbf16, #tpu.memory_space<vmem>>, vector<384x128xbf16>
    %cst_33 = arith.constant dense<0.000000e+00> : vector<16x128xf32>
    %94 = tpu.matmul %92, %93, %cst_33 {dimension_numbers = #tpu.dot_dimension_numbers<[1], [0], [0], [1], [0, 0, 1, 1], [], []>} : vector<16x384xbf16>, vector<384x128xbf16>, vector<16x128xf32> -> vector<16x128xf32>
    %c0_34 = arith.constant 0 : index
    %c0_35 = arith.constant 0 : index
    %95 = vector.load %arg5[%c0_34, %c0_35] : memref<1x128xf32, #tpu.memory_space<vmem>>, vector<1x128xf32>
    %96 = vector.broadcast %95 : vector<1x128xf32> to vector<16x128xf32>
    %97 = arith.addf %94, %96 : vector<16x128xf32>
    %98 = arith.addf %97, %57 : vector<16x128xf32>
    %cst_36 = arith.constant 0.00999999977 : f32
    %99 = vector.broadcast %cst_36 : f32 to vector<16x128xf32>
    %100 = arith.mulf %99, %98 : vector<16x128xf32>
    %101 = arith.maximumf %98, %100 : vector<16x128xf32>
    %102 = arith.truncf %101 : vector<16x128xf32> to vector<16x128xbf16>
    %c0_37 = arith.constant 0 : index
    %c0_38 = arith.constant 0 : index
    %103 = vector.load %arg6[%c0_37, %c0_38] : memref<16x128xbf16, #tpu.memory_space<vmem>>, vector<16x128xbf16>
    tpu.vector_store %arg6[%c0_37, %c0_38], %102 {strides = array<i32>} : memref<16x128xbf16, #tpu.memory_space<vmem>>, vector<16x128xbf16>,
    return
  }
  func.func @transform_0(%arg0: i32) -> (i32, i32) {
    %c0_i32 = arith.constant 0 : i32
    %c0_i32_0 = arith.constant 0 : i32
    return %arg0, %c0_i32 : i32, i32
  }
  func.func @transform_1(%arg0: i32) -> (i32, i32) {
    %c0_i32 = arith.constant 0 : i32
    %c0_i32_0 = arith.constant 0 : i32
    %c0_i32_1 = arith.constant 0 : i32
    return %c0_i32, %c0_i32_0 : i32, i32
  }
  func.func @transform_2(%arg0: i32) -> (i32, i32) {
    %c0_i32 = arith.constant 0 : i32
    %c0_i32_0 = arith.constant 0 : i32
    %c0_i32_1 = arith.constant 0 : i32
    return %c0_i32, %c0_i32_0 : i32, i32
  }
  func.func @transform_3(%arg0: i32) -> (i32, i32) {
    %c0_i32 = arith.constant 0 : i32
    %c0_i32_0 = arith.constant 0 : i32
    %c0_i32_1 = arith.constant 0 : i32
    return %c0_i32, %c0_i32_0 : i32, i32
  }
  func.func @transform_4(%arg0: i32) -> (i32, i32) {
    %c0_i32 = arith.constant 0 : i32
    %c0_i32_0 = arith.constant 0 : i32
    %c0_i32_1 = arith.constant 0 : i32
    return %c0_i32, %c0_i32_0 : i32, i32
  }
  func.func @transform_5(%arg0: i32) -> (i32, i32) {
    %c0_i32 = arith.constant 0 : i32
    %c0_i32_0 = arith.constant 0 : i32
    return %arg0, %c0_i32 : i32, i32
  }
}

</mosaic_0001>

<llo_original>
// kernel: tpu_custom_call.1
$region0: #{tpu_custom_call.1}
  #allocation0 [shape = 'u32[]', space=smem, size = 0x4, offset = 0x4, fixed_abs, tag = 'smem constant byte address 0x4 - core index']
  #allocation1 [shape = 'u32[144,128]{1,0:T(1,128)}', space=vmem, size = 0x12000, scoped, tag = 'internal scratch']
  %s0 = inlined_call_operand.hbm [shape: bf16[32,128], index: 0, kind: input, shape index: {}]
  %s1 = inlined_call_operand.hbm [shape: bf16[384,256], index: 1, kind: input, shape index: {}]
  %s2 = inlined_call_operand.vmem [shape: f32[1,256], index: 2, kind: input, shape index: {}]
  %s3 = inlined_call_operand.hbm [shape: bf16[384,128], index: 3, kind: input, shape index: {}]
  %s4 = inlined_call_operand.vmem [shape: f32[1,128], index: 4, kind: input, shape index: {}]
  %s5 = inlined_call_operand.hbm [shape: bf16[32,128], index: 5, kind: output, shape index: {}]
  %s6 = sld [smem:[#allocation0]]
  $region65: #{tpu_custom_call.1} parent=0
    _
  %s8 = ssub.s32 1, %s6
  %s9 = scalar_select 0, %s8, %s6
  $region1: #{tpu_custom_call.1} parent=0
    #allocation2 [shape = 'u8[8192]{0}', space=vmem, size = 0x2000, scoped, tag = 'input window, operand 0']
    #allocation3 [shape = 's32[2]{0}', space=sflag, size = 0x8, scoped, tag = 'scoped memory for tpu_custom_call.1']
    #allocation4 [shape = 's32[2]{0}', space=sflag, size = 0x8, scoped, tag = 'scoped memory for tpu_custom_call.1']
    #allocation5 [shape = 'u8[196608]{0}', space=vmem, size = 0x30000, scoped, tag = 'input window, operand 1, single buffered']
    #allocation6 [shape = 's32[1]{0}', space=sflag, size = 0x4, scoped, tag = 'scoped memory for tpu_custom_call.1']
    #allocation7 [shape = 'u8[98304]{0}', space=vmem, size = 0x18000, scoped, tag = 'input window, operand 3, single buffered']
    #allocation8 [shape = 'u8[8192]{0}', space=vmem, size = 0x2000, scoped, tag = 'output window, operand 0']
    %10 = vsyncpa [#allocation3], 0
    %s11 = scalar_lea.sflag [#allocation3], 1
    %12 = vsyncpa %s11, 0
    %13 = vsyncpa [#allocation6], 0
    %14 = vsyncpa [#allocation4], 0
    %s15 = scalar_lea.sflag [#allocation4], 1
    %16 = vsyncpa %s15, 0
    loop: start=0, step=1, limit=4
    $region2: #{tpu_custom_call.1} parent=1 // loop_pre_header
      _
    $region3: #{tpu_custom_call.1} parent=1 // loop_header
      %s18 = sphi 0, %s22
      %p19 = scmp.ge.s32.totalorder %s18, 4
      %s28 = sphi 0, %s30
      %s31 = sphi 0, %s28
      %s32 = sphi 0, %s31
      %s48 = sphi 0, %s32
      %s52 = sphi 0, %s52
      %s54 = sphi 0, %s52
      %s55 = sphi 0, %s54
      %s69 = sphi 0, %s55
      %s73 = sphi 0, %s73
      %s75 = sphi 0, %s73
      %s76 = sphi 0, %s75
      %s90 = sphi 0, %s76
      %s94 = sphi 0, %s94
      %s96 = sphi 0, %s94
      %s97 = sphi 0, %s96
      %s111 = sphi 0, %s97
      %s115 = sphi 0, %s115
      %s117 = sphi 0, %s115
      %s118 = sphi 0, %s117
      %s132 = sphi 0, %s118
      %s138 = sphi 0, %s140
      %s141 = sphi 0, %s138
      %s142 = sphi 0, %s141
      %s158 = sphi 0, %s142
    $region4: #{tpu_custom_call.1} parent=1 // loop_header_branch
      %21 = sbr.rel (%p19) target = $region8
    $region5: #{tpu_custom_call.1} parent=1 // loop_body
      %s23 = ssub.s32 %s18, 1
      %s24 = ssub.s32 %s18, 2
      %s25 = sadd.s32 %s18, 1
      %s26 = ssub.s32 %s18, %s25
      %p27 = scmp.eq.s32.totalorder %s26, 0
      %s29 = sadd.s32 %s28, 1
      %s30 = scalar_select %p27, %s28, %s29
      %p33 = pneg %p27
      %p34 = scmp.eq.s32.totalorder %s18, 1
      %p35 = por %p33, %p34
      %p36 = scmp.ne.s32.totalorder %s28, %s31
      %p37 = scmp.eq.s32.totalorder %s18, 0
      %p38 = por %p36, %p37
      %p39 = scmp.ne.s32.totalorder %s28, %s31
      %p40 = scmp.eq.s32.totalorder %s23, 1
      %p41 = por %p39, %p40
      %p42 = scmp.ne.s32.totalorder %s31, %s32
      %p43 = scmp.eq.s32.totalorder %s23, 0
      %p44 = por %p42, %p43
      %p45 = scmp.ne.s32.totalorder %s31, %s32
      %p46 = scmp.eq.s32.totalorder %s24, 1
      %p47 = por %p45, %p46
      %p49 = scmp.ne.s32.totalorder %s32, %s48
      %p50 = scmp.eq.s32.totalorder %s24, 0
      %p51 = por %p49, %p50
      %s53 = sadd.s32 %s52, 1
      %p56 = scmp.eq.s32.totalorder %s18, 1
      %p57 = scmp.ne.s32.totalorder %s52, %s54
      %p58 = scmp.eq.s32.totalorder %s18, 0
      %p59 = por %p57, %p58
      %p60 = scmp.ne.s32.totalorder %s52, %s54
      %p61 = scmp.eq.s32.totalorder %s23, 1
      %p62 = por %p60, %p61
      %p63 = scmp.ne.s32.totalorder %s54, %s55
      %p64 = scmp.eq.s32.totalorder %s23, 0
      %p65 = por %p63, %p64
      %p66 = scmp.ne.s32.totalorder %s54, %s55
      %p67 = scmp.eq.s32.totalorder %s24, 1
      %p68 = por %p66, %p67
      %p70 = scmp.ne.s32.totalorder %s55, %s69
      %p71 = scmp.eq.s32.totalorder %s24, 0
      %p72 = por %p70, %p71
      %s74 = sadd.s32 %s73, 1
      %p77 = scmp.eq.s32.totalorder %s18, 1
      %p78 = scmp.ne.s32.totalorder %s73, %s75
      %p79 = scmp.eq.s32.totalorder %s18, 0
      %p80 = por %p78, %p79
      %p81 = scmp.ne.s32.totalorder %s73, %s75
      %p82 = scmp.eq.s32.totalorder %s23, 1
      %p83 = por %p81, %p82
      %p84 = scmp.ne.s32.totalorder %s75, %s76
      %p85 = scmp.eq.s32.totalorder %s23, 0
      %p86 = por %p84, %p85
      %p87 = scmp.ne.s32.totalorder %s75, %s76
      %p88 = scmp.eq.s32.totalorder %s24, 1
      %p89 = por %p87, %p88
      %p91 = scmp.ne.s32.totalorder %s76, %s90
      %p92 = scmp.eq.s32.totalorder %s24, 0
      %p93 = por %p91, %p92
      %s95 = sadd.s32 %s94, 1
      %p98 = scmp.eq.s32.totalorder %s18, 1
      %p99 = scmp.ne.s32.totalorder %s94, %s96
      %p100 = scmp.eq.s32.totalorder %s18, 0
      %p101 = por %p99, %p100
      %p102 = scmp.ne.s32.totalorder %s94, %s96
      %p103 = scmp.eq.s32.totalorder %s23, 1
      %p104 = por %p102, %p103
      %p105 = scmp.ne.s32.totalorder %s96, %s97
      %p106 = scmp.eq.s32.totalorder %s23, 0
      %p107 = por %p105, %p106
      %p108 = scmp.ne.s32.totalorder %s96, %s97
      %p109 = scmp.eq.s32.totalorder %s24, 1
      %p110 = por %p108, %p109
      %p112 = scmp.ne.s32.totalorder %s97, %s111
      %p113 = scmp.eq.s32.totalorder %s24, 0
      %p114 = por %p112, %p113
      %s116 = sadd.s32 %s115, 1
      %p119 = scmp.eq.s32.totalorder %s18, 1
      %p120 = scmp.ne.s32.totalorder %s115, %s117
      %p121 = scmp.eq.s32.totalorder %s18, 0
      %p122 = por %p120, %p121
      %p123 = scmp.ne.s32.totalorder %s115, %s117
      %p124 = scmp.eq.s32.totalorder %s23, 1
      %p125 = por %p123, %p124
      %p126 = scmp.ne.s32.totalorder %s117, %s118
      %p127 = scmp.eq.s32.totalorder %s23, 0
      %p128 = por %p126, %p127
      %p129 = scmp.ne.s32.totalorder %s117, %s118
      %p130 = scmp.eq.s32.totalorder %s24, 1
      %p131 = por %p129, %p130
      %p133 = scmp.ne.s32.totalorder %s118, %s132
      %p134 = scmp.eq.s32.totalorder %s24, 0
      %p135 = por %p133, %p134
      %s136 = ssub.s32 %s18, %s25
      %p137 = scmp.eq.s32.totalorder %s136, 0
      %s139 = sadd.s32 %s138, 1
      %s140 = scalar_select %p137, %s138, %s139
      %p143 = pneg %p137
      %p144 = scmp.eq.s32.totalorder %s18, 1
      %p145 = por %p143, %p144
      %p146 = scmp.ne.s32.totalorder %s138, %s141
      %p147 = scmp.eq.s32.totalorder %s18, 0
      %p148 = por %p146, %p147
      %p149 = scmp.ne.s32.totalorder %s138, %s141
      %p150 = scmp.eq.s32.totalorder %s23, 1
      %p151 = por %p149, %p150
      %p152 = scmp.ne.s32.totalorder %s141, %s142
      %p153 = scmp.eq.s32.totalorder %s23, 0
      %p154 = por %p152, %p153
      %p155 = scmp.ne.s32.totalorder %s141, %s142
      %p156 = scmp.eq.s32.totalorder %s24, 1
      %p157 = por %p155, %p156
      %p159 = scmp.ne.s32.totalorder %s142, %s158
      %p160 = scmp.eq.s32.totalorder %s24, 0
      %p161 = por %p159, %p160
      %p162 = scmp.le.s32.totalorder 1, %s18
      %p163 = scmp.lt.s32.totalorder %s18, 3
      %p164 = pnand %p162, %p163
      %p165 = pneg %p164
      // Predicated region
      $region9: #{tpu_custom_call.1} parent=5 // pred_check
        _
      $region10: #{tpu_custom_call.1} parent=5 // pred_check_branch
        %167 = sbr.rel (%p164) target = $region12
      $region11: #{tpu_custom_call.1} parent=5 // pred_region
        %s168 = ssub.s32 %s18, 1
        // Predicated region
        $region13: #{tpu_custom_call.1} parent=11 // pred_check
          %p169 = pneg %p65
        $region14: #{tpu_custom_call.1} parent=11 // pred_check_branch
          %171 = sbr.rel (%p169) target = $region16
        $region15: #{tpu_custom_call.1} parent=11 // pred_region
          %s173 = ssub.s32 6144, 6144
          %174 = vsyncadd [#allocation6], %s173
          %s175 = sshll.u32 [#allocation5], 4
          %s176 = int_to_ptr.vmem [resolvable:$true] %s175
          %181 = dma.hbm_to_vmem [thread:$0]  %s1, 6144, %s176, [#allocation6], 128, 128, 8
        $region16: #{tpu_custom_call.1} parent=11 // pred_fallthru
          _
        // Predicated region
        $region17: #{tpu_custom_call.1} parent=11 // pred_check
          %p182 = pneg %p86
        $region18: #{tpu_custom_call.1} parent=11 // pred_check_branch
          %184 = sbr.rel (%p182) target = $region20
        $region19: #{tpu_custom_call.1} parent=11 // pred_region
          _
        $region20: #{tpu_custom_call.1} parent=11 // pred_fallthru
          _
        // Predicated region
        $region21: #{tpu_custom_call.1} parent=11 // pred_check
          %p185 = pneg %p107
        $region22: #{tpu_custom_call.1} parent=11 // pred_check_branch
          %187 = sbr.rel (%p185) target = $region24
        $region23: #{tpu_custom_call.1} parent=11 // pred_region
          %s189 = ssub.s32 3072, 3072
          %190 = vsyncadd [#allocation6], %s189
          %s191 = sshll.u32 [#allocation7], 4
          %s192 = int_to_ptr.vmem [resolvable:$true] %s191
          %197 = dma.hbm_to_vmem [thread:$0]  %s3, 3072, %s192, [#allocation6], 64, 64, 4
        $region24: #{tpu_custom_call.1} parent=11 // pred_fallthru
          _
        // Predicated region
        $region25: #{tpu_custom_call.1} parent=11 // pred_check
          %p198 = pneg %p128
        $region26: #{tpu_custom_call.1} parent=11 // pred_check_branch
          %200 = sbr.rel (%p198) target = $region28
        $region27: #{tpu_custom_call.1} parent=11 // pred_region
          _
        $region28: #{tpu_custom_call.1} parent=11 // pred_fallthru
          _
      $region12: #{tpu_custom_call.1} parent=5 // pred_fallthru
        _
      %p201 = scmp.lt.s32.totalorder %s18, 2
      // Predicated region
      $region29: #{tpu_custom_call.1} parent=5 // pred_check
        %p202 = pneg %p201
      $region30: #{tpu_custom_call.1} parent=5 // pred_check_branch
        %204 = sbr.rel (%p202) target = $region32
      $region31: #{tpu_custom_call.1} parent=5 // pred_region
        // Predicated region
        $region33: #{tpu_custom_call.1} parent=31 // pred_check
          %p205 = pneg %p38
        $region34: #{tpu_custom_call.1} parent=31 // pred_check_branch
          %207 = sbr.rel (%p205) target = $region36
        $region35: #{tpu_custom_call.1} parent=31 // pred_region
          %s208 = sand.u32 %s28, 1
          %s209 = scalar_lea.sflag [#allocation3], %s208
          %s210 = sand.u32 %s28, 1
          %s211 = smul.addr %s210, 8
          %s212 = scalar_lea.vmem [#allocation2], %s211
          %s213 = smul.u32 2, %s18
          %s215 = ssub.s32 128, 128
          %216 = vsyncadd %s209, %s215
          %s217 = smul.addr %s213, 64
          %s218 = scalar_lea.hbm %s0, %s217
          %s219 = sshll.u32 %s212, 4
          %s220 = int_to_ptr.vmem [resolvable:$true] %s219
          %225 = dma.hbm_to_vmem [thread:$0]  %s218, 128, %s220, %s209, 64, 64, 4
        $region36: #{tpu_custom_call.1} parent=31 // pred_fallthru
          _
      $region32: #{tpu_custom_call.1} parent=5 // pred_fallthru
        _
      %p226 = scmp.le.s32.totalorder 1, %s18
      %p227 = scmp.lt.s32.totalorder %s18, 3
      %p228 = pnand %p226, %p227
      %p229 = pneg %p228
      // Predicated region
      $region37: #{tpu_custom_call.1} parent=5 // pred_check
        _
      $region38: #{tpu_custom_call.1} parent=5 // pred_check_branch
        %231 = sbr.rel (%p228) target = $region40
      $region39: #{tpu_custom_call.1} parent=5 // pred_region
        %s232 = ssub.s32 %s18, 1
        %s233 = sand.u32 %s31, 1
        %s234 = scalar_lea.sflag [#allocation3], %s233
        %s235 = sand.u32 %s31, 1
        %s236 = smul.addr %s235, 8
        %s237 = scalar_lea.vmem [#allocation2], %s236
        // Predicated region
        $region41: #{tpu_custom_call.1} parent=39 // pred_check
          %p238 = pneg %p44
        $region42: #{tpu_custom_call.1} parent=39 // pred_check_branch
          %240 = sbr.rel (%p238) target = $region44
        $region43: #{tpu_custom_call.1} parent=39 // pred_region
          %241 = dma.done %s234, 128
        $region44: #{tpu_custom_call.1} parent=39 // pred_fallthru
          _
        // Predicated region
        $region45: #{tpu_custom_call.1} parent=39 // pred_check
          %p242 = pneg %p65
        $region46: #{tpu_custom_call.1} parent=39 // pred_check_branch
          %244 = sbr.rel (%p242) target = $region48
        $region47: #{tpu_custom_call.1} parent=39 // pred_region
          %245 = dma.done [#allocation6], 6144
        $region48: #{tpu_custom_call.1} parent=39 // pred_fallthru
          _
        // Predicated region
        $region49: #{tpu_custom_call.1} parent=39 // pred_check
          %p246 = pneg %p107
        $region50: #{tpu_custom_call.1} parent=39 // pred_check_branch
          %248 = sbr.rel (%p246) target = $region52
        $region51: #{tpu_custom_call.1} parent=39 // pred_region
          %249 = dma.done [#allocation6], 3072
        $region52: #{tpu_custom_call.1} parent=39 // pred_fallthru
          _
        %s250 = sand.u32 %s31, 1
        %s251 = scalar_lea.sflag [#allocation3], %s250
        %s252 = sand.u32 %s31, 1
        %s253 = smul.addr %s252, 8
        %s254 = scalar_lea.vmem [#allocation2], %s253
        %p255 = pneg %p44
        %p256 = pneg %p41
        %p257 = pneg %p65
        %p258 = pneg %p62
        %p259 = pneg %p86
        %p260 = pneg %p83
        %p261 = pneg %p107
        %p262 = pneg %p104
        %p263 = pneg %p128
        %p264 = pneg %p125
        %p265 = pneg %p154
        %p266 = pneg %p151
        %s267 = sand.u32 %s141, 1
        %s268 = scalar_lea.sflag [#allocation4], %s267
        %s269 = sand.u32 %s141, 1
        %s270 = smul.addr %s269, 8
        %s271 = scalar_lea.vmem [#allocation8], %s270
        %s272 = smul.u32 2, %s23
        %s273 = smul.u32 2, %s23
        %v275 = vlaneseq
        %v276 = vshrl.u32 %v275, 7
        %v277 = vadd.s32 %v276, 8
        %vm278 = vcmp.lt.s32.totalorder %v276, 0
        %v279 = vsub.s32 0, %v276
        %v280 = vsel %vm278, %v279, %v276
        %v281 = vshrl.u32 %v280, 4
        %v282 = vand.u32 %v280, 15
        %v283 = vsub.s32 0, %v282
        %v284 = vsel %vm278, %v283, %v282
        %vm285 = vcmp.lt.s32.totalorder %v277, 0
        %v286 = vsub.s32 0, %v277
        %v287 = vsel %vm285, %v286, %v277
        %v288 = vshrl.u32 %v287, 4
        %v289 = vand.u32 %v287, 15
        %v290 = vsub.s32 0, %v289
        %v291 = vsel %vm285, %v290, %v289
        %vm292 = vcmp.ne.s32.totalorder %v284, 0
        %vm293 = vcmp.ne.s32.totalorder %v291, 0
        %vm294 = vcmp.lt.s32.totalorder %v284, 0
        %vm295 = vcmp.lt.s32.totalorder %v291, 0
        %vm296 = vmand %vm294, %vm292
        %vm297 = vmand %vm295, %vm293
        %v298 = vadd.s32 %v284, 16
        %v299 = vadd.s32 %v291, 16
        %v300 = vsel %vm296, %v298, %v284
        %v301 = vsel %vm297, %v299, %v291
        %v302 = vld [vmem:[%s237] sm:$0xf]
        %v303 = vld [vmem:[%s237 + $0x4] sm:$0xf]
        %v304 = vunpack.c.l.bf16 %v302
        %v305 = vunpack.c.l.bf16 %v303
        %v306 = vrot.slane %v304, 7
        %v307 = vrot.slane %v305, 7
        %vm308 = vcmp.lt.s32.totalorder %v276, 1
        %v309 = vsel %vm308, %v306, %v307
        %v310 = vsel %vm308, %v307, %v306
        %v311 = vadd.s32 %v300, 4294967295
        %v312 = vadd.s32 %v301, 4294967295
        %vm313 = vcmp.ge.s32.totalorder %v311, 0
        %vm314 = vcmp.ge.s32.totalorder %v312, 0
        %vm315 = vcmp.lt.s32.totalorder %v311, 16
        %vm316 = vcmp.lt.s32.totalorder %v312, 16
        %vm317 = vmand %vm313, %vm315
        %vm318 = vmand %vm314, %vm316
        %v319 = vsel %vm317, 1, 0
        %v320 = vsel %vm318, 1, 0
        %vm321 = vcmp.eq.s32.totalorder %v319, 1
        %vm322 = vcmp.eq.s32.totalorder %v320, 1
        %v323 = vsel %vm321, %v310, 0.0
        %v324 = vsel %vm322, %v309, 0.0
        %v325 = vpack.c.bf16 %v324, %v323
        %v326 = vrot.slane %v304, 1
        %v327 = vrot.slane %v305, 1
        %vm328 = vcmp.lt.s32.totalorder %v276, 7
        %v329 = vsel %vm328, %v326, %v327
        %v330 = vsel %vm328, %v327, %v326
        %v331 = vadd.s32 %v300, 1
        %v332 = vadd.s32 %v301, 1
        %vm333 = vcmp.ge.s32.totalorder %v331, 0
        %vm334 = vcmp.ge.s32.totalorder %v332, 0
        %vm335 = vcmp.lt.s32.totalorder %v331, 16
        %vm336 = vcmp.lt.s32.totalorder %v332, 16
        %vm337 = vmand %vm333, %vm335
        %vm338 = vmand %vm334, %vm336
        %v339 = vsel %vm337, 1, 0
        %v340 = vsel %vm338, 1, 0
        %vm341 = vcmp.eq.s32.totalorder %v339, 1
        %vm342 = vcmp.eq.s32.totalorder %v340, 1
        %v343 = vsel %vm341, %v329, 0.0
        %v344 = vsel %vm342, %v330, 0.0
        %v345 = vpack.c.bf16 %v344, %v343
        %v348 = vunpack.c.l.b16 %v302
        %v349 = vunpack.c.l.b16 %v303
        %v350 = vpack.c.b16 %v349, %v348
        %v352 = vld [vmem:[#allocation5] sm:$0xff]
        %v353 = vld [vmem:[#allocation5 + $0x8] sm:$0xff]
        %v354 = vld [vmem:[#allocation5 + $0x10] sm:$0xff]
        %v355 = vld [vmem:[#allocation5 + $0x18] sm:$0xff]
        %v356 = vld [vmem:[#allocation5 + $0x20] sm:$0xff]
        %v357 = vld [vmem:[#allocation5 + $0x28] sm:$0xff]
        %v358 = vld [vmem:[#allocation5 + $0x30] sm:$0xff]
        %v359 = vld [vmem:[#allocation5 + $0x38] sm:$0xff]
        %v360 = vld [vmem:[#allocation5 + $0x40] sm:$0xff]
        %v361 = vld [vmem:[#allocation5 + $0x48] sm:$0xff]
        %v362 = vld [vmem:[#allocation5 + $0x50] sm:$0xff]
        %v363 = vld [vmem:[#allocation5 + $0x58] sm:$0xff]
        %v364 = vld [vmem:[#allocation5 + $0x60] sm:$0xff]
        %v365 = vld [vmem:[#allocation5 + $0x68] sm:$0xff]
        %v366 = vld [vmem:[#allocation5 + $0x70] sm:$0xff]
        %v367 = vld [vmem:[#allocation5 + $0x78] sm:$0xff]
        %v368 = vld [vmem:[#allocation5 + $0x80] sm:$0xff]
        %v369 = vld [vmem:[#allocation5 + $0x88] sm:$0xff]
        %v370 = vld [vmem:[#allocation5 + $0x90] sm:$0xff]
        %v371 = vld [vmem:[#allocation5 + $0x98] sm:$0xff]
        %v372 = vld [vmem:[#allocation5 + $0xa0] sm:$0xff]
        %v373 = vld [vmem:[#allocation5 + $0xa8] sm:$0xff]
        %v374 = vld [vmem:[#allocation5 + $0xb0] sm:$0xff]
        %v375 = vld [vmem:[#allocation5 + $0xb8] sm:$0xff]
        %v376 = vld [vmem:[#allocation5 + $0xc0] sm:$0xff]
        %v377 = vld [vmem:[#allocation5 + $0xc8] sm:$0xff]
        %v378 = vld [vmem:[#allocation5 + $0xd0] sm:$0xff]
        %v379 = vld [vmem:[#allocation5 + $0xd8] sm:$0xff]
        %v380 = vld [vmem:[#allocation5 + $0xe0] sm:$0xff]
        %v381 = vld [vmem:[#allocation5 + $0xe8] sm:$0xff]
        %v382 = vld [vmem:[#allocation5 + $0xf0] sm:$0xff]
        %v383 = vld [vmem:[#allocation5 + $0xf8] sm:$0xff]
        %v384 = vld [vmem:[#allocation5 + $0x100] sm:$0xff]
        %v385 = vld [vmem:[#allocation5 + $0x108] sm:$0xff]
        %v386 = vld [vmem:[#allocation5 + $0x110] sm:$0xff]
        %v387 = vld [vmem:[#allocation5 + $0x118] sm:$0xff]
        %v388 = vld [vmem:[#allocation5 + $0x120] sm:$0xff]
        %v389 = vld [vmem:[#allocation5 + $0x128] sm:$0xff]
        %v390 = vld [vmem:[#allocation5 + $0x130] sm:$0xff]
        %v391 = vld [vmem:[#allocation5 + $0x138] sm:$0xff]
        %v392 = vld [vmem:[#allocation5 + $0x140] sm:$0xff]
        %v393 = vld [vmem:[#allocation5 + $0x148] sm:$0xff]
        %v394 = vld [vmem:[#allocation5 + $0x150] sm:$0xff]
        %v395 = vld [vmem:[#allocation5 + $0x158] sm:$0xff]
        %v396 = vld [vmem:[#allocation5 + $0x160] sm:$0xff]
        %v397 = vld [vmem:[#allocation5 + $0x168] sm:$0xff]
        %v398 = vld [vmem:[#allocation5 + $0x170] sm:$0xff]
        %v399 = vld [vmem:[#allocation5 + $0x178] sm:$0xff]
        %v400 = vld [vmem:[%s2] sm:$0x3]
        %v402 = vlaneseq
        %v403 = vshrl.u32 %v402, 7
        %v404 = vsub.s32 0, %v403
        %v405 = vrot.slane %v400, %v404
        %v406 = vlaneseq
        %v407 = vshrl.u32 %v406, 7
        %v408 = vsub.s32 1, %v407
        %v409 = vrot.slane %v400, %v408
        %v460 = vunpack.c.l.b16 %v352
        %v461 = vunpack.c.h.b16 %v352
        %v462 = vunpack.c.l.b16 %v353
        %v463 = vunpack.c.h.b16 %v353
        %v464 = vunpack.c.l.b16 %v354
        %v465 = vunpack.c.h.b16 %v354
        %v466 = vunpack.c.l.b16 %v355
        %v467 = vunpack.c.h.b16 %v355
        %v468 = vunpack.c.l.b16 %v356
        %v469 = vunpack.c.h.b16 %v356
        %v470 = vunpack.c.l.b16 %v357
        %v471 = vunpack.c.h.b16 %v357
        %v472 = vunpack.c.l.b16 %v358
        %v473 = vunpack.c.h.b16 %v358
        %v474 = vunpack.c.l.b16 %v359
        %v475 = vunpack.c.h.b16 %v359
        %v476 = vunpack.c.l.b16 %v360
        %v477 = vunpack.c.h.b16 %v360
        %v478 = vunpack.c.l.b16 %v361
        %v479 = vunpack.c.h.b16 %v361
        %v480 = vunpack.c.l.b16 %v362
        %v481 = vunpack.c.h.b16 %v362
        %v482 = vunpack.c.l.b16 %v363
        %v483 = vunpack.c.h.b16 %v363
        %v484 = vunpack.c.l.b16 %v364
        %v485 = vunpack.c.h.b16 %v364
        %v486 = vunpack.c.l.b16 %v365
        %v487 = vunpack.c.h.b16 %v365
        %v488 = vunpack.c.l.b16 %v366
        %v489 = vunpack.c.h.b16 %v366
        %v490 = vunpack.c.l.b16 %v367
        %v491 = vunpack.c.h.b16 %v367
        %v492 = vunpack.c.l.b16 %v368
        %v493 = vunpack.c.h.b16 %v368
        %v494 = vunpack.c.l.b16 %v369
        %v495 = vunpack.c.h.b16 %v369
        %v496 = vunpack.c.l.b16 %v370
        %v497 = vunpack.c.h.b16 %v370
        %v498 = vunpack.c.l.b16 %v371
        %v499 = vunpack.c.h.b16 %v371
        %v500 = vunpack.c.l.b16 %v372
        %v501 = vunpack.c.h.b16 %v372
        %v502 = vunpack.c.l.b16 %v373
        %v503 = vunpack.c.h.b16 %v373
        %v504 = vunpack.c.l.b16 %v374
        %v505 = vunpack.c.h.b16 %v374
        %v506 = vunpack.c.l.b16 %v375
        %v507 = vunpack.c.h.b16 %v375
        %v508 = vunpack.c.l.b16 %v376
        %v509 = vunpack.c.h.b16 %v376
        %v510 = vunpack.c.l.b16 %v377
        %v511 = vunpack.c.h.b16 %v377
        %v512 = vunpack.c.l.b16 %v378
        %v513 = vunpack.c.h.b16 %v378
        %v514 = vunpack.c.l.b16 %v379
        %v515 = vunpack.c.h.b16 %v379
        %v516 = vunpack.c.l.b16 %v380
        %v517 = vunpack.c.h.b16 %v380
        %v518 = vunpack.c.l.b16 %v381
        %v519 = vunpack.c.h.b16 %v381
        %v520 = vunpack.c.l.b16 %v382
        %v521 = vunpack.c.h.b16 %v382
        %v522 = vunpack.c.l.b16 %v383
        %v523 = vunpack.c.h.b16 %v383
        %v524 = vunpack.c.l.b16 %v384
        %v525 = vunpack.c.h.b16 %v384
        %v526 = vunpack.c.l.b16 %v385
        %v527 = vunpack.c.h.b16 %v385
        %v528 = vunpack.c.l.b16 %v386
        %v529 = vunpack.c.h.b16 %v386
        %v530 = vunpack.c.l.b16 %v387
        %v531 = vunpack.c.h.b16 %v387
        %v532 = vunpack.c.l.b16 %v388
        %v533 = vunpack.c.h.b16 %v388
        %v534 = vunpack.c.l.b16 %v389
        %v535 = vunpack.c.h.b16 %v389
        %v536 = vunpack.c.l.b16 %v390
        %v537 = vunpack.c.h.b16 %v390
        %v538 = vunpack.c.l.b16 %v391
        %v539 = vunpack.c.h.b16 %v391
        %v540 = vunpack.c.l.b16 %v392
        %v541 = vunpack.c.h.b16 %v392
        %v542 = vunpack.c.l.b16 %v393
        %v543 = vunpack.c.h.b16 %v393
        %v544 = vunpack.c.l.b16 %v394
        %v545 = vunpack.c.h.b16 %v394
        %v546 = vunpack.c.l.b16 %v395
        %v547 = vunpack.c.h.b16 %v395
        %v548 = vunpack.c.l.b16 %v396
        %v549 = vunpack.c.h.b16 %v396
        %v550 = vunpack.c.l.b16 %v397
        %v551 = vunpack.c.h.b16 %v397
        %v552 = vunpack.c.l.b16 %v398
        %v553 = vunpack.c.h.b16 %v398
        %v554 = vunpack.c.l.b16 %v399
        %v555 = vunpack.c.h.b16 %v399
        %v556 = vpack.c.b16 %v462, %v460
        %v557 = vpack.c.b16 %v463, %v461
        %v558 = vpack.c.b16 %v466, %v464
        %v559 = vpack.c.b16 %v467, %v465
        %v560 = vpack.c.b16 %v470, %v468
        %v561 = vpack.c.b16 %v471, %v469
        %v562 = vpack.c.b16 %v474, %v472
        %v563 = vpack.c.b16 %v475, %v473
        %v564 = vpack.c.b16 %v478, %v476
        %v565 = vpack.c.b16 %v479, %v477
        %v566 = vpack.c.b16 %v482, %v480
        %v567 = vpack.c.b16 %v483, %v481
        %v568 = vpack.c.b16 %v486, %v484
        %v569 = vpack.c.b16 %v487, %v485
        %v570 = vpack.c.b16 %v490, %v488
        %v571 = vpack.c.b16 %v491, %v489
        %v572 = vpack.c.b16 %v494, %v492
        %v573 = vpack.c.b16 %v495, %v493
        %v574 = vpack.c.b16 %v498, %v496
        %v575 = vpack.c.b16 %v499, %v497
        %v576 = vpack.c.b16 %v502, %v500
        %v577 = vpack.c.b16 %v503, %v501
        %v578 = vpack.c.b16 %v506, %v504
        %v579 = vpack.c.b16 %v507, %v505
        %v580 = vpack.c.b16 %v510, %v508
        %v581 = vpack.c.b16 %v511, %v509
        %v582 = vpack.c.b16 %v514, %v512
        %v583 = vpack.c.b16 %v515, %v513
        %v584 = vpack.c.b16 %v518, %v516
        %v585 = vpack.c.b16 %v519, %v517
        %v586 = vpack.c.b16 %v522, %v520
        %v587 = vpack.c.b16 %v523, %v521
        %v588 = vpack.c.b16 %v526, %v524
        %v589 = vpack.c.b16 %v527, %v525
        %v590 = vpack.c.b16 %v530, %v528
        %v591 = vpack.c.b16 %v531, %v529
        %v592 = vpack.c.b16 %v534, %v532
        %v593 = vpack.c.b16 %v535, %v533
        %v594 = vpack.c.b16 %v538, %v536
        %v595 = vpack.c.b16 %v539, %v537
        %v596 = vpack.c.b16 %v542, %v540
        %v597 = vpack.c.b16 %v543, %v541
        %v598 = vpack.c.b16 %v546, %v544
        %v599 = vpack.c.b16 %v547, %v545
        %v600 = vpack.c.b16 %v550, %v548
        %v601 = vpack.c.b16 %v551, %v549
        %v602 = vpack.c.b16 %v554, %v552
        %v603 = vpack.c.b16 %v555, %v553
        %652 = vmatprep.subr.bf16.mxu0 %v557
        %653 = vmatpush1.bf16.msra.mxu0 %v556
        %654 = vmatprep.subr.bf16.mxu0 %v559
        %655 = vmatpush1.bf16.msra.mxu0 %v558
        %656 = vmatprep.subr.bf16.mxu0 %v561
        %657 = vmatpush1.bf16.msra.mxu0 %v560
        %658 = vmatprep.subr.bf16.mxu0 %v563
        %659 = vmatpush1.bf16.msra.mxu0 %v562
        %660 = vmatprep.subr.bf16.mxu0 %v565
        %661 = vmatpush1.bf16.msra.mxu0 %v564
        %662 = vmatprep.subr.bf16.mxu0 %v567
        %663 = vmatpush1.bf16.msra.mxu0 %v566
        %664 = vmatprep.subr.bf16.mxu0 %v569
        %665 = vmatpush1.bf16.msra.mxu0 %v568
        %666 = vmatprep.subr.bf16.mxu0 %v571
        %667 = vmatpush1.bf16.msra.mxu0 %v570
        %668 = vmatprep.subr.bf16.mxu0 %v573
        %669 = vmatpush1.bf16.msra.mxu0 %v572
        %670 = vmatprep.subr.bf16.mxu0 %v575
        %671 = vmatpush1.bf16.msra.mxu0 %v574
        %672 = vmatprep.subr.bf16.mxu0 %v577
        %673 = vmatpush1.bf16.msra.mxu0 %v576
        %674 = vmatprep.subr.bf16.mxu0 %v579
        %675 = vmatpush1.bf16.msra.mxu0 %v578
        %676 = vmatprep.subr.bf16.mxu0 %v581
        %677 = vmatpush1.bf16.msra.mxu0 %v580
        %678 = vmatprep.subr.bf16.mxu0 %v583
        %679 = vmatpush1.bf16.msra.mxu0 %v582
        %680 = vmatprep.subr.bf16.mxu0 %v585
        %681 = vmatpush1.bf16.msra.mxu0 %v584
        %682 = vmatprep.subr.bf16.mxu0 %v587
        %683 = vmatpush1.bf16.msra.mxu0 %v586
        %684 = vmatprep.mubr.bf16.mxu0 %v350
        %685 = vmatmul.mubr.bf16.gmra.mrb[0].mxu0 %v325
        %v686 = vpop.f32.mrb[0].mxu0
        %v687 = vadd.f32 %v405, %v686
        %v688 = vpop.f32.mrb[0].mxu0
        %v689 = vadd.f32 %v409, %v688
        %v690 = vpop.f32.mrb[0].mxu0
        %v691 = vadd.f32 %v405, %v690
        %v692 = vpop.f32.mrb[0].mxu0
        %v693 = vadd.f32 %v409, %v692
        %694 = vdwg.mxu0
        %695 = vmatprep.subr.bf16.mxu0 %v589
        %696 = vmatpush1.bf16.msra.mxu0 %v588
        %697 = vmatprep.subr.bf16.mxu0 %v591
        %698 = vmatpush1.bf16.msra.mxu0 %v590
        %699 = vmatprep.subr.bf16.mxu0 %v593
        %700 = vmatpush1.bf16.msra.mxu0 %v592
        %701 = vmatprep.subr.bf16.mxu0 %v595
        %702 = vmatpush1.bf16.msra.mxu0 %v594
        %703 = vmatprep.subr.bf16.mxu0 %v597
        %704 = vmatpush1.bf16.msra.mxu0 %v596
        %705 = vmatprep.subr.bf16.mxu0 %v599
        %706 = vmatpush1.bf16.msra.mxu0 %v598
        %707 = vmatprep.subr.bf16.mxu0 %v601
        %708 = vmatpush1.bf16.msra.mxu0 %v600
        %709 = vmatprep.subr.bf16.mxu0 %v603
        %710 = vmatpush1.bf16.msra.mxu0 %v602
        %711 = vmatprep.subr.bf16.mxu0 0
        %712 = vmatpush1.bf16.msra.mxu0 0
        %713 = vmatprep.subr.bf16.mxu0 0
        %714 = vmatpush1.bf16.msra.mxu0 0
        %715 = vmatprep.subr.bf16.mxu0 0
        %716 = vmatpush1.bf16.msra.mxu0 0
        %717 = vmatprep.subr.bf16.mxu0 0
        %718 = vmatpush1.bf16.msra.mxu0 0
        %719 = vmatprep.subr.bf16.mxu0 0
        %720 = vmatpush1.bf16.msra.mxu0 0
        %721 = vmatprep.subr.bf16.mxu0 0
        %722 = vmatpush1.bf16.msra.mxu0 0
        %723 = vmatprep.subr.bf16.mxu0 0
        %724 = vmatpush1.bf16.msra.mxu0 0
        %725 = vmatprep.subr.bf16.mxu0 0
        %726 = vmatpush1.bf16.msra.mxu0 0
        %727 = vmatprep.mubr.bf16.mxu0 0
        %728 = vmatmul.mubr.bf16.gmra.mrb[0].mxu0 %v345
        %v729 = vpop.f32.mrb[0].mxu0
        %v730 = vadd.f32 %v687, %v729
        %v731 = vpop.f32.mrb[0].mxu0
        %v732 = vadd.f32 %v689, %v731
        %v733 = vpop.f32.mrb[0].mxu0
        %v734 = vadd.f32 %v691, %v733
        %v735 = vpop.f32.mrb[0].mxu0
        %v736 = vadd.f32 %v693, %v735
        %737 = vdwg.mxu0
        %v738 = vmul.f32 %v730, 0.01
        %v739 = vmul.f32 %v734, 0.01
        %v740 = vmax.f32 %v730, %v738
        %v741 = vmax.f32 %v734, %v739
        %v742 = vrot.slane %v740, 7
        %v743 = vrot.slane %v741, 7
        %v744 = vsel %vm308, %v742, %v743
        %v745 = vsel %vm308, %v743, %v742
        %v746 = vsel %vm321, %v745, 0.0
        %v747 = vsel %vm322, %v744, 0.0
        %v748 = vpack.c.bf16 %v747, %v746
        %v749 = vpack.c.bf16 %v741, %v740
        %v750 = vrot.slane %v740, 1
        %v751 = vrot.slane %v741, 1
        %v752 = vsel %vm328, %v750, %v751
        %v753 = vsel %vm328, %v751, %v750
        %v754 = vsel %vm341, %v752, 0.0
        %v755 = vsel %vm342, %v753, 0.0
        %v756 = vpack.c.bf16 %v755, %v754
        %v757 = vld [vmem:[#allocation7] sm:$0xf]
        %v758 = vld [vmem:[#allocation7 + $0x4] sm:$0xf]
        %v759 = vld [vmem:[#allocation7 + $0x8] sm:$0xf]
        %v760 = vld [vmem:[#allocation7 + $0xc] sm:$0xf]
        %v761 = vld [vmem:[#allocation7 + $0x10] sm:$0xf]
        %v762 = vld [vmem:[#allocation7 + $0x14] sm:$0xf]
        %v763 = vld [vmem:[#allocation7 + $0x18] sm:$0xf]
        %v764 = vld [vmem:[#allocation7 + $0x1c] sm:$0xf]
        %v765 = vld [vmem:[#allocation7 + $0x20] sm:$0xf]
        %v766 = vld [vmem:[#allocation7 + $0x24] sm:$0xf]
        %v767 = vld [vmem:[#allocation7 + $0x28] sm:$0xf]
        %v768 = vld [vmem:[#allocation7 + $0x2c] sm:$0xf]
        %v769 = vld [vmem:[#allocation7 + $0x30] sm:$0xf]
        %v770 = vld [vmem:[#allocation7 + $0x34] sm:$0xf]
        %v771 = vld [vmem:[#allocation7 + $0x38] sm:$0xf]
        %v772 = vld [vmem:[#allocation7 + $0x3c] sm:$0xf]
        %v773 = vld [vmem:[#allocation7 + $0x40] sm:$0xf]
        %v774 = vld [vmem:[#allocation7 + $0x44] sm:$0xf]
        %v775 = vld [vmem:[#allocation7 + $0x48] sm:$0xf]
        %v776 = vld [vmem:[#allocation7 + $0x4c] sm:$0xf]
        %v777 = vld [vmem:[#allocation7 + $0x50] sm:$0xf]
        %v778 = vld [vmem:[#allocation7 + $0x54] sm:$0xf]
        %v779 = vld [vmem:[#allocation7 + $0x58] sm:$0xf]
        %v780 = vld [vmem:[#allocation7 + $0x5c] sm:$0xf]
        %v781 = vld [vmem:[#allocation7 + $0x60] sm:$0xf]
        %v782 = vld [vmem:[#allocation7 + $0x64] sm:$0xf]
        %v783 = vld [vmem:[#allocation7 + $0x68] sm:$0xf]
        %v784 = vld [vmem:[#allocation7 + $0x6c] sm:$0xf]
        %v785 = vld [vmem:[#allocation7 + $0x70] sm:$0xf]
        %v786 = vld [vmem:[#allocation7 + $0x74] sm:$0xf]
        %v787 = vld [vmem:[#allocation7 + $0x78] sm:$0xf]
        %v788 = vld [vmem:[#allocation7 + $0x7c] sm:$0xf]
        %v789 = vld [vmem:[#allocation7 + $0x80] sm:$0xf]
        %v790 = vld [vmem:[#allocation7 + $0x84] sm:$0xf]
        %v791 = vld [vmem:[#allocation7 + $0x88] sm:$0xf]
        %v792 = vld [vmem:[#allocation7 + $0x8c] sm:$0xf]
        %v793 = vld [vmem:[#allocation7 + $0x90] sm:$0xf]
        %v794 = vld [vmem:[#allocation7 + $0x94] sm:$0xf]
        %v795 = vld [vmem:[#allocation7 + $0x98] sm:$0xf]
        %v796 = vld [vmem:[#allocation7 + $0x9c] sm:$0xf]
        %v797 = vld [vmem:[#allocation7 + $0xa0] sm:$0xf]
        %v798 = vld [vmem:[#allocation7 + $0xa4] sm:$0xf]
        %v799 = vld [vmem:[#allocation7 + $0xa8] sm:$0xf]
        %v800 = vld [vmem:[#allocation7 + $0xac] sm:$0xf]
        %v801 = vld [vmem:[#allocation7 + $0xb0] sm:$0xf]
        %v802 = vld [vmem:[#allocation7 + $0xb4] sm:$0xf]
        %v803 = vld [vmem:[#allocation7 + $0xb8] sm:$0xf]
        %v804 = vld [vmem:[#allocation7 + $0xbc] sm:$0xf]
        %v805 = vld [vmem:[%s4] sm:$0x1]
        %v807 = vlaneseq
        %v808 = vshrl.u32 %v807, 7
        %v809 = vsub.s32 0, %v808
        %v810 = vrot.slane %v805, %v809
        %v860 = vunpack.c.l.b16 %v757
        %v861 = vunpack.c.l.b16 %v758
        %v862 = vunpack.c.l.b16 %v759
        %v863 = vunpack.c.l.b16 %v760
        %v864 = vunpack.c.l.b16 %v761
        %v865 = vunpack.c.l.b16 %v762
        %v866 = vunpack.c.l.b16 %v763
        %v867 = vunpack.c.l.b16 %v764
        %v868 = vunpack.c.l.b16 %v765
        %v869 = vunpack.c.l.b16 %v766
        %v870 = vunpack.c.l.b16 %v767
        %v871 = vunpack.c.l.b16 %v768
        %v872 = vunpack.c.l.b16 %v769
        %v873 = vunpack.c.l.b16 %v770
        %v874 = vunpack.c.l.b16 %v771
        %v875 = vunpack.c.l.b16 %v772
        %v876 = vunpack.c.l.b16 %v773
        %v877 = vunpack.c.l.b16 %v774
        %v878 = vunpack.c.l.b16 %v775
        %v879 = vunpack.c.l.b16 %v776
        %v880 = vunpack.c.l.b16 %v777
        %v881 = vunpack.c.l.b16 %v778
        %v882 = vunpack.c.l.b16 %v779
        %v883 = vunpack.c.l.b16 %v780
        %v884 = vunpack.c.l.b16 %v781
        %v885 = vunpack.c.l.b16 %v782
        %v886 = vunpack.c.l.b16 %v783
        %v887 = vunpack.c.l.b16 %v784
        %v888 = vunpack.c.l.b16 %v785
        %v889 = vunpack.c.l.b16 %v786
        %v890 = vunpack.c.l.b16 %v787
        %v891 = vunpack.c.l.b16 %v788
        %v892 = vunpack.c.l.b16 %v789
        %v893 = vunpack.c.l.b16 %v790
        %v894 = vunpack.c.l.b16 %v791
        %v895 = vunpack.c.l.b16 %v792
        %v896 = vunpack.c.l.b16 %v793
        %v897 = vunpack.c.l.b16 %v794
        %v898 = vunpack.c.l.b16 %v795
        %v899 = vunpack.c.l.b16 %v796
        %v900 = vunpack.c.l.b16 %v797
        %v901 = vunpack.c.l.b16 %v798
        %v902 = vunpack.c.l.b16 %v799
        %v903 = vunpack.c.l.b16 %v800
        %v904 = vunpack.c.l.b16 %v801
        %v905 = vunpack.c.l.b16 %v802
        %v906 = vunpack.c.l.b16 %v803
        %v907 = vunpack.c.l.b16 %v804
        %v908 = vpack.c.b16 %v861, %v860
        %v909 = vpack.c.b16 %v863, %v862
        %v910 = vpack.c.b16 %v865, %v864
        %v911 = vpack.c.b16 %v867, %v866
        %v912 = vpack.c.b16 %v869, %v868
        %v913 = vpack.c.b16 %v871, %v870
        %v914 = vpack.c.b16 %v873, %v872
        %v915 = vpack.c.b16 %v875, %v874
        %v916 = vpack.c.b16 %v877, %v876
        %v917 = vpack.c.b16 %v879, %v878
        %v918 = vpack.c.b16 %v881, %v880
        %v919 = vpack.c.b16 %v883, %v882
        %v920 = vpack.c.b16 %v885, %v884
        %v921 = vpack.c.b16 %v887, %v886
        %v922 = vpack.c.b16 %v889, %v888
        %v923 = vpack.c.b16 %v891, %v890
        %v924 = vpack.c.b16 %v893, %v892
        %v925 = vpack.c.b16 %v895, %v894
        %v926 = vpack.c.b16 %v897, %v896
        %v927 = vpack.c.b16 %v899, %v898
        %v928 = vpack.c.b16 %v901, %v900
        %v929 = vpack.c.b16 %v903, %v902
        %v930 = vpack.c.b16 %v905, %v904
        %v931 = vpack.c.b16 %v907, %v906
        %956 = vmatprep.subr.bf16.mxu0 0
        %957 = vmatpush1.bf16.msra.mxu0 %v908
        %958 = vmatprep.subr.bf16.mxu0 0
        %959 = vmatpush1.bf16.msra.mxu0 %v909
        %960 = vmatprep.subr.bf16.mxu0 0
        %961 = vmatpush1.bf16.msra.mxu0 %v910
        %962 = vmatprep.subr.bf16.mxu0 0
        %963 = vmatpush1.bf16.msra.mxu0 %v911
        %964 = vmatprep.subr.bf16.mxu0 0
        %965 = vmatpush1.bf16.msra.mxu0 %v912
        %966 = vmatprep.subr.bf16.mxu0 0
        %967 = vmatpush1.bf16.msra.mxu0 %v913
        %968 = vmatprep.subr.bf16.mxu0 0
        %969 = vmatpush1.bf16.msra.mxu0 %v914
        %970 = vmatprep.subr.bf16.mxu0 0
        %971 = vmatpush1.bf16.msra.mxu0 %v915
        %972 = vmatprep.subr.bf16.mxu0 0
        %973 = vmatpush1.bf16.msra.mxu0 %v916
        %974 = vmatprep.subr.bf16.mxu0 0
        %975 = vmatpush1.bf16.msra.mxu0 %v917
        %976 = vmatprep.subr.bf16.mxu0 0
        %977 = vmatpush1.bf16.msra.mxu0 %v918
        %978 = vmatprep.subr.bf16.mxu0 0
        %979 = vmatpush1.bf16.msra.mxu0 %v919
        %980 = vmatprep.subr.bf16.mxu0 0
        %981 = vmatpush1.bf16.msra.mxu0 %v920
        %982 = vmatprep.subr.bf16.mxu0 0
        %983 = vmatpush1.bf16.msra.mxu0 %v921
        %984 = vmatprep.subr.bf16.mxu0 0
        %985 = vmatpush1.bf16.msra.mxu0 %v922
        %986 = vmatprep.subr.bf16.mxu0 0
        %987 = vmatpush1.bf16.msra.mxu0 %v923
        %988 = vmatprep.mubr.bf16.mxu0 %v749
        %989 = vmatmul.mubr.bf16.gmra.mrb[0].mxu0 %v748
        %v990 = vpop.f32.mrb[0].mxu0
        %v991 = vadd.f32 %v810, %v990
        %v992 = vpop.f32.mrb[0].mxu0
        %v993 = vpop.f32.mrb[0].mxu0
        %v994 = vadd.f32 %v810, %v993
        %v995 = vpop.f32.mrb[0].mxu0
        %996 = vdwg.mxu0
        %997 = vmatprep.subr.bf16.mxu0 0
        %998 = vmatpush1.bf16.msra.mxu0 %v924
        %999 = vmatprep.subr.bf16.mxu0 0
        %1000 = vmatpush1.bf16.msra.mxu0 %v925
        %1001 = vmatprep.subr.bf16.mxu0 0
        %1002 = vmatpush1.bf16.msra.mxu0 %v926
        %1003 = vmatprep.subr.bf16.mxu0 0
        %1004 = vmatpush1.bf16.msra.mxu0 %v927
        %1005 = vmatprep.subr.bf16.mxu0 0
        %1006 = vmatpush1.bf16.msra.mxu0 %v928
        %1007 = vmatprep.subr.bf16.mxu0 0
        %1008 = vmatpush1.bf16.msra.mxu0 %v929
        %1009 = vmatprep.subr.bf16.mxu0 0
        %1010 = vmatpush1.bf16.msra.mxu0 %v930
        %1011 = vmatprep.subr.bf16.mxu0 0
        %1012 = vmatpush1.bf16.msra.mxu0 %v931
        %1013 = vmatprep.subr.bf16.mxu0 0
        %1014 = vmatpush1.bf16.msra.mxu0 0
        %1015 = vmatprep.subr.bf16.mxu0 0
        %1016 = vmatpush1.bf16.msra.mxu0 0
        %1017 = vmatprep.subr.bf16.mxu0 0
        %1018 = vmatpush1.bf16.msra.mxu0 0
        %1019 = vmatprep.subr.bf16.mxu0 0
        %1020 = vmatpush1.bf16.msra.mxu0 0
        %1021 = vmatprep.subr.bf16.mxu0 0
        %1022 = vmatpush1.bf16.msra.mxu0 0
        %1023 = vmatprep.subr.bf16.mxu0 0
        %1024 = vmatpush1.bf16.msra.mxu0 0
        %1025 = vmatprep.subr.bf16.mxu0 0
        %1026 = vmatpush1.bf16.msra.mxu0 0
        %1027 = vmatprep.subr.bf16.mxu0 0
        %1028 = vmatpush1.bf16.msra.mxu0 0
        %1029 = vmatprep.mubr.bf16.mxu0 0
        %1030 = vmatmul.mubr.bf16.gmra.mrb[0].mxu0 %v756
        %v1031 = vpop.f32.mrb[0].mxu0
        %v1032 = vadd.f32 %v991, %v1031
        %v1033 = vpop.f32.mrb[0].mxu0
        %v1034 = vpop.f32.mrb[0].mxu0
        %v1035 = vadd.f32 %v994, %v1034
        %v1036 = vpop.f32.mrb[0].mxu0
        %1037 = vdwg.mxu0
        %v1038 = vadd.f32 %v1032, %v732
        %v1039 = vadd.f32 %v1035, %v736
        %v1040 = vmul.f32 %v1038, 0.01
        %v1041 = vmul.f32 %v1039, 0.01
        %v1042 = vmax.f32 %v1038, %v1040
        %v1043 = vmax.f32 %v1039, %v1041
        %v1044 = vpack.c.bf16 %v1043, %v1042
        %v1046 = vunpack.c.l.b16 %v1044
        %v1047 = vunpack.c.h.b16 %v1044
        %v1048 = vpack.c.b16 %v1046, %v1046
        %v1049 = vpack.c.b16 %v1047, %v1047
        %1052 = vst [vmem:[%s271] sm:$0xf] %v1048
        %1053 = vst [vmem:[%s271 + $0x4] sm:$0xf] %v1049
        %s1054 = sand.u32 %s141, 1
        %s1055 = scalar_lea.sflag [#allocation4], %s1054
        %s1056 = sand.u32 %s141, 1
        %s1057 = smul.addr %s1056, 8
        %s1058 = scalar_lea.vmem [#allocation8], %s1057
        // Predicated region
        $region53: #{tpu_custom_call.1} parent=39 // pred_check
          %p1059 = pneg %p151
        $region54: #{tpu_custom_call.1} parent=39 // pred_check_branch
          %1061 = sbr.rel (%p1059) target = $region56
        $region55: #{tpu_custom_call.1} parent=39 // pred_region
          %s1062 = smul.u32 2, %s23
          %s1064 = ssub.s32 128, 128
          %1065 = vsyncadd %s1055, %s1064
          %s1066 = smul.addr %s1062, 64
          %s1067 = scalar_lea.hbm %s5, %s1066
          %s1068 = sshll.u32 %s1058, 4
          %s1069 = int_to_ptr.vmem [resolvable:$true] %s1068
          %1074 = dma.vmem_to_hbm [thread:$0]  %s1069, 128, %s1067, %s1055, 64, 64, 4
        $region56: #{tpu_custom_call.1} parent=39 // pred_fallthru
          _
      $region40: #{tpu_custom_call.1} parent=5 // pred_fallthru
        _
      %p1075 = scmp.le.s32.totalorder 2, %s18
      // Predicated region
      $region57: #{tpu_custom_call.1} parent=5 // pred_check
        %p1076 = pneg %p1075
      $region58: #{tpu_custom_call.1} parent=5 // pred_check_branch
        %1078 = sbr.rel (%p1076) target = $region60
      $region59: #{tpu_custom_call.1} parent=5 // pred_region
        %s1079 = ssub.s32 %s18, 2
        // Predicated region
        $region61: #{tpu_custom_call.1} parent=59 // pred_check
          %p1080 = pneg %p157
        $region62: #{tpu_custom_call.1} parent=59 // pred_check_branch
          %1082 = sbr.rel (%p1080) target = $region64
        $region63: #{tpu_custom_call.1} parent=59 // pred_region
          %s1083 = sand.u32 %s142, 1
          %s1084 = scalar_lea.sflag [#allocation4], %s1083
          %s1085 = sand.u32 %s142, 1
          %s1086 = smul.addr %s1085, 8
          %s1087 = scalar_lea.vmem [#allocation8], %s1086
          %1088 = dma.done %s1084, 128
        $region64: #{tpu_custom_call.1} parent=59 // pred_fallthru
          _
      $region60: #{tpu_custom_call.1} parent=5 // pred_fallthru
        _
    $region6: #{tpu_custom_call.1} parent=1 // loop_footer
      %s22 = sadd.s32 1, %s18
    $region7: #{tpu_custom_call.1} parent=1 // loop_footer_branch
      %17 = sbr.rel target = $region3
    $region8: #{tpu_custom_call.1} parent=1 // loop_exit
      _
    %1089 = vsyncpa [#allocation3], 1
    %s1090 = scalar_lea.sflag [#allocation3], 1
    %1091 = vsyncpa %s1090, 1
    %1092 = vsyncpa [#allocation6], 1
    %1093 = vsyncpa [#allocation4], 1
    %s1094 = scalar_lea.sflag [#allocation4], 1
    %1095 = vsyncpa %s1094, 1

// kernel: tpu_custom_call.1
$region0: #{tpu_custom_call.1}
  #allocation0 [shape = 'u32[]', space=smem, size = 0x4, offset = 0x4, fixed_abs, tag = 'smem constant byte address 0x4 - core index']
  #allocation1 [shape = 'u32[144,128]{1,0:T(1,128)}', space=vmem, size = 0x12000, scoped, tag = 'internal scratch']
  %s0 = inlined_call_operand.hbm [shape: bf16[32,128], index: 0, kind: input, shape index: {}]
  %s1 = inlined_call_operand.hbm [shape: bf16[384,256], index: 1, kind: input, shape index: {}]
  %s2 = inlined_call_operand.vmem [shape: f32[1,256], index: 2, kind: input, shape index: {}]
  %s3 = inlined_call_operand.hbm [shape: bf16[384,128], index: 3, kind: input, shape index: {}]
  %s4 = inlined_call_operand.vmem [shape: f32[1,128], index: 4, kind: input, shape index: {}]
  %s5 = inlined_call_operand.hbm [shape: bf16[32,128], index: 5, kind: output, shape index: {}]
  %s6 = sld [smem:[#allocation0]]
  $region65: #{tpu_custom_call.1} parent=0
    _
  %s8 = ssub.s32 1, %s6
  %s9 = scalar_select 0, %s8, %s6
  $region1: #{tpu_custom_call.1} parent=0
    #allocation2 [shape = 'u8[8192]{0}', space=vmem, size = 0x2000, scoped, tag = 'input window, operand 0']
    #allocation3 [shape = 's32[2]{0}', space=sflag, size = 0x8, scoped, tag = 'scoped memory for tpu_custom_call.1']
    #allocation4 [shape = 's32[2]{0}', space=sflag, size = 0x8, scoped, tag = 'scoped memory for tpu_custom_call.1']
    #allocation5 [shape = 'u8[196608]{0}', space=vmem, size = 0x30000, scoped, tag = 'input window, operand 1, single buffered']
    #allocation6 [shape = 's32[1]{0}', space=sflag, size = 0x4, scoped, tag = 'scoped memory for tpu_custom_call.1']
    #allocation7 [shape = 'u8[98304]{0}', space=vmem, size = 0x18000, scoped, tag = 'input window, operand 3, single buffered']
    #allocation8 [shape = 'u8[8192]{0}', space=vmem, size = 0x2000, scoped, tag = 'output window, operand 0']
    %10 = vsyncpa [#allocation3], 0
    %s11 = scalar_lea.sflag [#allocation3], 1
    %12 = vsyncpa %s11, 0
    %13 = vsyncpa [#allocation6], 0
    %14 = vsyncpa [#allocation4], 0
    %s15 = scalar_lea.sflag [#allocation4], 1
    %16 = vsyncpa %s15, 0
    loop: start=0, step=1, limit=4
    $region2: #{tpu_custom_call.1} parent=1 // loop_pre_header
      _
    $region3: #{tpu_custom_call.1} parent=1 // loop_header
      %s18 = sphi 0, %s22
      %p19 = scmp.ge.s32.totalorder %s18, 4
      %s28 = sphi 0, %s30
      %s31 = sphi 0, %s28
      %s32 = sphi 0, %s31
      %s48 = sphi 0, %s32
      %s52 = sphi 0, %s52
      %s54 = sphi 0, %s52
      %s55 = sphi 0, %s54
      %s69 = sphi 0, %s55
      %s73 = sphi 0, %s73
      %s75 = sphi 0, %s73
      %s76 = sphi 0, %s75
      %s90 = sphi 0, %s76
      %s94 = sphi 0, %s94
      %s96 = sphi 0, %s94
      %s97 = sphi 0, %s96
      %s111 = sphi 0, %s97
      %s115 = sphi 0, %s115
      %s117 = sphi 0, %s115
      %s118 = sphi 0, %s117
      %s132 = sphi 0, %s118
      %s138 = sphi 0, %s140
      %s141 = sphi 0, %s138
      %s142 = sphi 0, %s141
      %s158 = sphi 0, %s142
    $region4: #{tpu_custom_call.1} parent=1 // loop_header_branch
      %21 = sbr.rel (%p19) target = $region8
    $region5: #{tpu_custom_call.1} parent=1 // loop_body
      %s23 = ssub.s32 %s18, 1
      %s24 = ssub.s32 %s18, 2
      %s25 = sadd.s32 %s18, 1
      %s26 = ssub.s32 %s18, %s25
      %p27 = scmp.eq.s32.totalorder %s26, 0
      %s29 = sadd.s32 %s28, 1
      %s30 = scalar_select %p27, %s28, %s29
      %p33 = pneg %p27
      %p34 = scmp.eq.s32.totalorder %s18, 1
      %p35 = por %p33, %p34
      %p36 = scmp.ne.s32.totalorder %s28, %s31
      %p37 = scmp.eq.s32.totalorder %s18, 0
      %p38 = por %p36, %p37
      %p39 = scmp.ne.s32.totalorder %s28, %s31
      %p40 = scmp.eq.s32.totalorder %s23, 1
      %p41 = por %p39, %p40
      %p42 = scmp.ne.s32.totalorder %s31, %s32
      %p43 = scmp.eq.s32.totalorder %s23, 0
      %p44 = por %p42, %p43
      %p45 = scmp.ne.s32.totalorder %s31, %s32
      %p46 = scmp.eq.s32.totalorder %s24, 1
      %p47 = por %p45, %p46
      %p49 = scmp.ne.s32.totalorder %s32, %s48
      %p50 = scmp.eq.s32.totalorder %s24, 0
      %p51 = por %p49, %p50
      %s53 = sadd.s32 %s52, 1
      %p56 = scmp.eq.s32.totalorder %s18, 1
      %p57 = scmp.ne.s32.totalorder %s52, %s54
      %p58 = scmp.eq.s32.totalorder %s18, 0
      %p59 = por %p57, %p58
      %p60 = scmp.ne.s32.totalorder %s52, %s54
      %p61 = scmp.eq.s32.totalorder %s23, 1
      %p62 = por %p60, %p61
      %p63 = scmp.ne.s32.totalorder %s54, %s55
      %p64 = scmp.eq.s32.totalorder %s23, 0
      %p65 = por %p63, %p64
      %p66 = scmp.ne.s32.totalorder %s54, %s55
      %p67 = scmp.eq.s32.totalorder %s24, 1
      %p68 = por %p66, %p67
      %p70 = scmp.ne.s32.totalorder %s55, %s69
      %p71 = scmp.eq.s32.totalorder %s24, 0
      %p72 = por %p70, %p71
      %s74 = sadd.s32 %s73, 1
      %p77 = scmp.eq.s32.totalorder %s18, 1
      %p78 = scmp.ne.s32.totalorder %s73, %s75
      %p79 = scmp.eq.s32.totalorder %s18, 0
      %p80 = por %p78, %p79
      %p81 = scmp.ne.s32.totalorder %s73, %s75
      %p82 = scmp.eq.s32.totalorder %s23, 1
      %p83 = por %p81, %p82
      %p84 = scmp.ne.s32.totalorder %s75, %s76
      %p85 = scmp.eq.s32.totalorder %s23, 0
      %p86 = por %p84, %p85
      %p87 = scmp.ne.s32.totalorder %s75, %s76
      %p88 = scmp.eq.s32.totalorder %s24, 1
      %p89 = por %p87, %p88
      %p91 = scmp.ne.s32.totalorder %s76, %s90
      %p92 = scmp.eq.s32.totalorder %s24, 0
      %p93 = por %p91, %p92
      %s95 = sadd.s32 %s94, 1
      %p98 = scmp.eq.s32.totalorder %s18, 1
      %p99 = scmp.ne.s32.totalorder %s94, %s96
      %p100 = scmp.eq.s32.totalorder %s18, 0
      %p101 = por %p99, %p100
      %p102 = scmp.ne.s32.totalorder %s94, %s96
      %p103 = scmp.eq.s32.totalorder %s23, 1
      %p104 = por %p102, %p103
      %p105 = scmp.ne.s32.totalorder %s96, %s97
      %p106 = scmp.eq.s32.totalorder %s23, 0
      %p107 = por %p105, %p106
      %p108 = scmp.ne.s32.totalorder %s96, %s97
      %p109 = scmp.eq.s32.totalorder %s24, 1
      %p110 = por %p108, %p109
      %p112 = scmp.ne.s32.totalorder %s97, %s111
      %p113 = scmp.eq.s32.totalorder %s24, 0
      %p114 = por %p112, %p113
      %s116 = sadd.s32 %s115, 1
      %p119 = scmp.eq.s32.totalorder %s18, 1
      %p120 = scmp.ne.s32.totalorder %s115, %s117
      %p121 = scmp.eq.s32.totalorder %s18, 0
      %p122 = por %p120, %p121
      %p123 = scmp.ne.s32.totalorder %s115, %s117
      %p124 = scmp.eq.s32.totalorder %s23, 1
      %p125 = por %p123, %p124
      %p126 = scmp.ne.s32.totalorder %s117, %s118
      %p127 = scmp.eq.s32.totalorder %s23, 0
      %p128 = por %p126, %p127
      %p129 = scmp.ne.s32.totalorder %s117, %s118
      %p130 = scmp.eq.s32.totalorder %s24, 1
      %p131 = por %p129, %p130
      %p133 = scmp.ne.s32.totalorder %s118, %s132
      %p134 = scmp.eq.s32.totalorder %s24, 0
      %p135 = por %p133, %p134
      %s136 = ssub.s32 %s18, %s25
      %p137 = scmp.eq.s32.totalorder %s136, 0
      %s139 = sadd.s32 %s138, 1
      %s140 = scalar_select %p137, %s138, %s139
      %p143 = pneg %p137
      %p144 = scmp.eq.s32.totalorder %s18, 1
      %p145 = por %p143, %p144
      %p146 = scmp.ne.s32.totalorder %s138, %s141
      %p147 = scmp.eq.s32.totalorder %s18, 0
      %p148 = por %p146, %p147
      %p149 = scmp.ne.s32.totalorder %s138, %s141
      %p150 = scmp.eq.s32.totalorder %s23, 1
      %p151 = por %p149, %p150
      %p152 = scmp.ne.s32.totalorder %s141, %s142
      %p153 = scmp.eq.s32.totalorder %s23, 0
      %p154 = por %p152, %p153
      %p155 = scmp.ne.s32.totalorder %s141, %s142
      %p156 = scmp.eq.s32.totalorder %s24, 1
      %p157 = por %p155, %p156
      %p159 = scmp.ne.s32.totalorder %s142, %s158
      %p160 = scmp.eq.s32.totalorder %s24, 0
      %p161 = por %p159, %p160
      %p162 = scmp.le.s32.totalorder 1, %s18
      %p163 = scmp.lt.s32.totalorder %s18, 3
      %p164 = pnand %p162, %p163
      %p165 = pneg %p164
      // Predicated region
      $region9: #{tpu_custom_call.1} parent=5 // pred_check
        _
      $region10: #{tpu_custom_call.1} parent=5 // pred_check_branch
        %167 = sbr.rel (%p164) target = $region12
      $region11: #{tpu_custom_call.1} parent=5 // pred_region
        %s168 = ssub.s32 %s18, 1
        // Predicated region
        $region13: #{tpu_custom_call.1} parent=11 // pred_check
          %p169 = pneg %p65
        $region14: #{tpu_custom_call.1} parent=11 // pred_check_branch
          %171 = sbr.rel (%p169) target = $region16
        $region15: #{tpu_custom_call.1} parent=11 // pred_region
          %s173 = ssub.s32 6144, 6144
          %174 = vsyncadd [#allocation6], %s173
          %s175 = sshll.u32 [#allocation5], 4
          %s176 = int_to_ptr.vmem [resolvable:$true] %s175
          %181 = dma.hbm_to_vmem [thread:$0]  %s1, 6144, %s176, [#allocation6], 128, 128, 8
        $region16: #{tpu_custom_call.1} parent=11 // pred_fallthru
          _
        // Predicated region
        $region17: #{tpu_custom_call.1} parent=11 // pred_check
          %p182 = pneg %p86
        $region18: #{tpu_custom_call.1} parent=11 // pred_check_branch
          %184 = sbr.rel (%p182) target = $region20
        $region19: #{tpu_custom_call.1} parent=11 // pred_region
          _
        $region20: #{tpu_custom_call.1} parent=11 // pred_fallthru
          _
        // Predicated region
        $region21: #{tpu_custom_call.1} parent=11 // pred_check
          %p185 = pneg %p107
        $region22: #{tpu_custom_call.1} parent=11 // pred_check_branch
          %187 = sbr.rel (%p185) target = $region24
        $region23: #{tpu_custom_call.1} parent=11 // pred_region
          %s189 = ssub.s32 3072, 3072
          %190 = vsyncadd [#allocation6], %s189
          %s191 = sshll.u32 [#allocation7], 4
          %s192 = int_to_ptr.vmem [resolvable:$true] %s191
          %197 = dma.hbm_to_vmem [thread:$0]  %s3, 3072, %s192, [#allocation6], 64, 64, 4
        $region24: #{tpu_custom_call.1} parent=11 // pred_fallthru
          _
        // Predicated region
        $region25: #{tpu_custom_call.1} parent=11 // pred_check
          %p198 = pneg %p128
        $region26: #{tpu_custom_call.1} parent=11 // pred_check_branch
          %200 = sbr.rel (%p198) target = $region28
        $region27: #{tpu_custom_call.1} parent=11 // pred_region
          _
        $region28: #{tpu_custom_call.1} parent=11 // pred_fallthru
          _
      $region12: #{tpu_custom_call.1} parent=5 // pred_fallthru
        _
      %p201 = scmp.lt.s32.totalorder %s18, 2
      // Predicated region
      $region29: #{tpu_custom_call.1} parent=5 // pred_check
        %p202 = pneg %p201
      $region30: #{tpu_custom_call.1} parent=5 // pred_check_branch
        %204 = sbr.rel (%p202) target = $region32
      $region31: #{tpu_custom_call.1} parent=5 // pred_region
        // Predicated region
        $region33: #{tpu_custom_call.1} parent=31 // pred_check
          %p205 = pneg %p38
        $region34: #{tpu_custom_call.1} parent=31 // pred_check_branch
          %207 = sbr.rel (%p205) target = $region36
        $region35: #{tpu_custom_call.1} parent=31 // pred_region
          %s208 = sand.u32 %s28, 1
          %s209 = scalar_lea.sflag [#allocation3], %s208
          %s210 = sand.u32 %s28, 1
          %s211 = smul.addr %s210, 8
          %s212 = scalar_lea.vmem [#allocation2], %s211
          %s213 = smul.u32 2, %s18
          %s215 = ssub.s32 128, 128
          %216 = vsyncadd %s209, %s215
          %s217 = smul.addr %s213, 64
          %s218 = scalar_lea.hbm %s0, %s217
          %s219 = sshll.u32 %s212, 4
          %s220 = int_to_ptr.vmem [resolvable:$true] %s219
          %225 = dma.hbm_to_vmem [thread:$0]  %s218, 128, %s220, %s209, 64, 64, 4
        $region36: #{tpu_custom_call.1} parent=31 // pred_fallthru
          _
      $region32: #{tpu_custom_call.1} parent=5 // pred_fallthru
        _
      %p226 = scmp.le.s32.totalorder 1, %s18
      %p227 = scmp.lt.s32.totalorder %s18, 3
      %p228 = pnand %p226, %p227
      %p229 = pneg %p228
      // Predicated region
      $region37: #{tpu_custom_call.1} parent=5 // pred_check
        _
      $region38: #{tpu_custom_call.1} parent=5 // pred_check_branch
        %231 = sbr.rel (%p228) target = $region40
      $region39: #{tpu_custom_call.1} parent=5 // pred_region
        %s232 = ssub.s32 %s18, 1
        %s233 = sand.u32 %s31, 1
        %s234 = scalar_lea.sflag [#allocation3], %s233
        %s235 = sand.u32 %s31, 1
        %s236 = smul.addr %s235, 8
        %s237 = scalar_lea.vmem [#allocation2], %s236
        // Predicated region
        $region41: #{tpu_custom_call.1} parent=39 // pred_check
          %p238 = pneg %p44
        $region42: #{tpu_custom_call.1} parent=39 // pred_check_branch
          %240 = sbr.rel (%p238) target = $region44
        $region43: #{tpu_custom_call.1} parent=39 // pred_region
          %241 = dma.done %s234, 128
        $region44: #{tpu_custom_call.1} parent=39 // pred_fallthru
          _
        // Predicated region
        $region45: #{tpu_custom_call.1} parent=39 // pred_check
          %p242 = pneg %p65
        $region46: #{tpu_custom_call.1} parent=39 // pred_check_branch
          %244 = sbr.rel (%p242) target = $region48
        $region47: #{tpu_custom_call.1} parent=39 // pred_region
          %245 = dma.done [#allocation6], 6144
        $region48: #{tpu_custom_call.1} parent=39 // pred_fallthru
          _
        // Predicated region
        $region49: #{tpu_custom_call.1} parent=39 // pred_check
          %p246 = pneg %p107
        $region50: #{tpu_custom_call.1} parent=39 // pred_check_branch
          %248 = sbr.rel (%p246) target = $region52
        $region51: #{tpu_custom_call.1} parent=39 // pred_region
          %249 = dma.done [#allocation6], 3072
        $region52: #{tpu_custom_call.1} parent=39 // pred_fallthru
          _
        %s250 = sand.u32 %s31, 1
        %s251 = scalar_lea.sflag [#allocation3], %s250
        %s252 = sand.u32 %s31, 1
        %s253 = smul.addr %s252, 8
        %s254 = scalar_lea.vmem [#allocation2], %s253
        %p255 = pneg %p44
        %p256 = pneg %p41
        %p257 = pneg %p65
        %p258 = pneg %p62
        %p259 = pneg %p86
        %p260 = pneg %p83
        %p261 = pneg %p107
        %p262 = pneg %p104
        %p263 = pneg %p128
        %p264 = pneg %p125
        %p265 = pneg %p154
        %p266 = pneg %p151
        %s267 = sand.u32 %s141, 1
        %s268 = scalar_lea.sflag [#allocation4], %s267
        %s269 = sand.u32 %s141, 1
        %s270 = smul.addr %s269, 8
        %s271 = scalar_lea.vmem [#allocation8], %s270
        %s272 = smul.u32 2, %s23
        %s273 = smul.u32 2, %s23
        %v275 = vlaneseq
        %v276 = vshrl.u32 %v275, 7
        %v277 = vadd.s32 %v276, 8
        %vm278 = vcmp.lt.s32.totalorder %v276, 0
        %v279 = vsub.s32 0, %v276
        %v280 = vsel %vm278, %v279, %v276
        %v281 = vshrl.u32 %v280, 4
        %v282 = vand.u32 %v280, 15
        %v283 = vsub.s32 0, %v282
        %v284 = vsel %vm278, %v283, %v282
        %vm285 = vcmp.lt.s32.totalorder %v277, 0
        %v286 = vsub.s32 0, %v277
        %v287 = vsel %vm285, %v286, %v277
        %v288 = vshrl.u32 %v287, 4
        %v289 = vand.u32 %v287, 15
        %v290 = vsub.s32 0, %v289
        %v291 = vsel %vm285, %v290, %v289
        %vm292 = vcmp.ne.s32.totalorder %v284, 0
        %vm293 = vcmp.ne.s32.totalorder %v291, 0
        %vm294 = vcmp.lt.s32.totalorder %v284, 0
        %vm295 = vcmp.lt.s32.totalorder %v291, 0
        %vm296 = vmand %vm294, %vm292
        %vm297 = vmand %vm295, %vm293
        %v298 = vadd.s32 %v284, 16
        %v299 = vadd.s32 %v291, 16
        %v300 = vsel %vm296, %v298, %v284
        %v301 = vsel %vm297, %v299, %v291
        %v302 = vld [vmem:[%s237] sm:$0xf]
        %v303 = vld [vmem:[%s237 + $0x4] sm:$0xf]
        %v304 = vunpack.c.l.bf16 %v302
        %v305 = vunpack.c.l.bf16 %v303
        %v306 = vrot.slane %v304, 7
        %v307 = vrot.slane %v305, 7
        %vm308 = vcmp.lt.s32.totalorder %v276, 1
        %v309 = vsel %vm308, %v306, %v307
        %v310 = vsel %vm308, %v307, %v306
        %v311 = vadd.s32 %v300, 4294967295
        %v312 = vadd.s32 %v301, 4294967295
        %vm313 = vcmp.ge.s32.totalorder %v311, 0
        %vm314 = vcmp.ge.s32.totalorder %v312, 0
        %vm315 = vcmp.lt.s32.totalorder %v311, 16
        %vm316 = vcmp.lt.s32.totalorder %v312, 16
        %vm317 = vmand %vm313, %vm315
        %vm318 = vmand %vm314, %vm316
        %v319 = vsel %vm317, 1, 0
        %v320 = vsel %vm318, 1, 0
        %vm321 = vcmp.eq.s32.totalorder %v319, 1
        %vm322 = vcmp.eq.s32.totalorder %v320, 1
        %v323 = vsel %vm321, %v310, 0.0
        %v324 = vsel %vm322, %v309, 0.0
        %v325 = vpack.c.bf16 %v324, %v323
        %v326 = vrot.slane %v304, 1
        %v327 = vrot.slane %v305, 1
        %vm328 = vcmp.lt.s32.totalorder %v276, 7
        %v329 = vsel %vm328, %v326, %v327
        %v330 = vsel %vm328, %v327, %v326
        %v331 = vadd.s32 %v300, 1
        %v332 = vadd.s32 %v301, 1
        %vm333 = vcmp.ge.s32.totalorder %v331, 0
        %vm334 = vcmp.ge.s32.totalorder %v332, 0
        %vm335 = vcmp.lt.s32.totalorder %v331, 16
        %vm336 = vcmp.lt.s32.totalorder %v332, 16
        %vm337 = vmand %vm333, %vm335
        %vm338 = vmand %vm334, %vm336
        %v339 = vsel %vm337, 1, 0
        %v340 = vsel %vm338, 1, 0
        %vm341 = vcmp.eq.s32.totalorder %v339, 1
        %vm342 = vcmp.eq.s32.totalorder %v340, 1
        %v343 = vsel %vm341, %v329, 0.0
        %v344 = vsel %vm342, %v330, 0.0
        %v345 = vpack.c.bf16 %v344, %v343
        %v348 = vunpack.c.l.b16 %v302
        %v349 = vunpack.c.l.b16 %v303
        %v350 = vpack.c.b16 %v349, %v348
        %v352 = vld [vmem:[#allocation5] sm:$0xff]
        %v353 = vld [vmem:[#allocation5 + $0x8] sm:$0xff]
        %v354 = vld [vmem:[#allocation5 + $0x10] sm:$0xff]
        %v355 = vld [vmem:[#allocation5 + $0x18] sm:$0xff]
        %v356 = vld [vmem:[#allocation5 + $0x20] sm:$0xff]
        %v357 = vld [vmem:[#allocation5 + $0x28] sm:$0xff]
        %v358 = vld [vmem:[#allocation5 + $0x30] sm:$0xff]
        %v359 = vld [vmem:[#allocation5 + $0x38] sm:$0xff]
        %v360 = vld [vmem:[#allocation5 + $0x40] sm:$0xff]
        %v361 = vld [vmem:[#allocation5 + $0x48] sm:$0xff]
        %v362 = vld [vmem:[#allocation5 + $0x50] sm:$0xff]
        %v363 = vld [vmem:[#allocation5 + $0x58] sm:$0xff]
        %v364 = vld [vmem:[#allocation5 + $0x60] sm:$0xff]
        %v365 = vld [vmem:[#allocation5 + $0x68] sm:$0xff]
        %v366 = vld [vmem:[#allocation5 + $0x70] sm:$0xff]
        %v367 = vld [vmem:[#allocation5 + $0x78] sm:$0xff]
        %v368 = vld [vmem:[#allocation5 + $0x80] sm:$0xff]
        %v369 = vld [vmem:[#allocation5 + $0x88] sm:$0xff]
        %v370 = vld [vmem:[#allocation5 + $0x90] sm:$0xff]
        %v371 = vld [vmem:[#allocation5 + $0x98] sm:$0xff]
        %v372 = vld [vmem:[#allocation5 + $0xa0] sm:$0xff]
        %v373 = vld [vmem:[#allocation5 + $0xa8] sm:$0xff]
        %v374 = vld [vmem:[#allocation5 + $0xb0] sm:$0xff]
        %v375 = vld [vmem:[#allocation5 + $0xb8] sm:$0xff]
        %v376 = vld [vmem:[#allocation5 + $0xc0] sm:$0xff]
        %v377 = vld [vmem:[#allocation5 + $0xc8] sm:$0xff]
        %v378 = vld [vmem:[#allocation5 + $0xd0] sm:$0xff]
        %v379 = vld [vmem:[#allocation5 + $0xd8] sm:$0xff]
        %v380 = vld [vmem:[#allocation5 + $0xe0] sm:$0xff]
        %v381 = vld [vmem:[#allocation5 + $0xe8] sm:$0xff]
        %v382 = vld [vmem:[#allocation5 + $0xf0] sm:$0xff]
        %v383 = vld [vmem:[#allocation5 + $0xf8] sm:$0xff]
        %v384 = vld [vmem:[#allocation5 + $0x100] sm:$0xff]
        %v385 = vld [vmem:[#allocation5 + $0x108] sm:$0xff]
        %v386 = vld [vmem:[#allocation5 + $0x110] sm:$0xff]
        %v387 = vld [vmem:[#allocation5 + $0x118] sm:$0xff]
        %v388 = vld [vmem:[#allocation5 + $0x120] sm:$0xff]
        %v389 = vld [vmem:[#allocation5 + $0x128] sm:$0xff]
        %v390 = vld [vmem:[#allocation5 + $0x130] sm:$0xff]
        %v391 = vld [vmem:[#allocation5 + $0x138] sm:$0xff]
        %v392 = vld [vmem:[#allocation5 + $0x140] sm:$0xff]
        %v393 = vld [vmem:[#allocation5 + $0x148] sm:$0xff]
        %v394 = vld [vmem:[#allocation5 + $0x150] sm:$0xff]
        %v395 = vld [vmem:[#allocation5 + $0x158] sm:$0xff]
        %v396 = vld [vmem:[#allocation5 + $0x160] sm:$0xff]
        %v397 = vld [vmem:[#allocation5 + $0x168] sm:$0xff]
        %v398 = vld [vmem:[#allocation5 + $0x170] sm:$0xff]
        %v399 = vld [vmem:[#allocation5 + $0x178] sm:$0xff]
        %v400 = vld [vmem:[%s2] sm:$0x3]
        %v402 = vlaneseq
        %v403 = vshrl.u32 %v402, 7
        %v404 = vsub.s32 0, %v403
        %v405 = vrot.slane %v400, %v404
        %v406 = vlaneseq
        %v407 = vshrl.u32 %v406, 7
        %v408 = vsub.s32 1, %v407
        %v409 = vrot.slane %v400, %v408
        %v460 = vunpack.c.l.b16 %v352
        %v461 = vunpack.c.h.b16 %v352
        %v462 = vunpack.c.l.b16 %v353
        %v463 = vunpack.c.h.b16 %v353
        %v464 = vunpack.c.l.b16 %v354
        %v465 = vunpack.c.h.b16 %v354
        %v466 = vunpack.c.l.b16 %v355
        %v467 = vunpack.c.h.b16 %v355
        %v468 = vunpack.c.l.b16 %v356
        %v469 = vunpack.c.h.b16 %v356
        %v470 = vunpack.c.l.b16 %v357
        %v471 = vunpack.c.h.b16 %v357
        %v472 = vunpack.c.l.b16 %v358
        %v473 = vunpack.c.h.b16 %v358
        %v474 = vunpack.c.l.b16 %v359
        %v475 = vunpack.c.h.b16 %v359
        %v476 = vunpack.c.l.b16 %v360
        %v477 = vunpack.c.h.b16 %v360
        %v478 = vunpack.c.l.b16 %v361
        %v479 = vunpack.c.h.b16 %v361
        %v480 = vunpack.c.l.b16 %v362
        %v481 = vunpack.c.h.b16 %v362
        %v482 = vunpack.c.l.b16 %v363
        %v483 = vunpack.c.h.b16 %v363
        %v484 = vunpack.c.l.b16 %v364
        %v485 = vunpack.c.h.b16 %v364
        %v486 = vunpack.c.l.b16 %v365
        %v487 = vunpack.c.h.b16 %v365
        %v488 = vunpack.c.l.b16 %v366
        %v489 = vunpack.c.h.b16 %v366
        %v490 = vunpack.c.l.b16 %v367
        %v491 = vunpack.c.h.b16 %v367
        %v492 = vunpack.c.l.b16 %v368
        %v493 = vunpack.c.h.b16 %v368
        %v494 = vunpack.c.l.b16 %v369
        %v495 = vunpack.c.h.b16 %v369
        %v496 = vunpack.c.l.b16 %v370
        %v497 = vunpack.c.h.b16 %v370
        %v498 = vunpack.c.l.b16 %v371
        %v499 = vunpack.c.h.b16 %v371
        %v500 = vunpack.c.l.b16 %v372
        %v501 = vunpack.c.h.b16 %v372
        %v502 = vunpack.c.l.b16 %v373
        %v503 = vunpack.c.h.b16 %v373
        %v504 = vunpack.c.l.b16 %v374
        %v505 = vunpack.c.h.b16 %v374
        %v506 = vunpack.c.l.b16 %v375
        %v507 = vunpack.c.h.b16 %v375
        %v508 = vunpack.c.l.b16 %v376
        %v509 = vunpack.c.h.b16 %v376
        %v510 = vunpack.c.l.b16 %v377
        %v511 = vunpack.c.h.b16 %v377
        %v512 = vunpack.c.l.b16 %v378
        %v513 = vunpack.c.h.b16 %v378
        %v514 = vunpack.c.l.b16 %v379
        %v515 = vunpack.c.h.b16 %v379
        %v516 = vunpack.c.l.b16 %v380
        %v517 = vunpack.c.h.b16 %v380
        %v518 = vunpack.c.l.b16 %v381
        %v519 = vunpack.c.h.b16 %v381
        %v520 = vunpack.c.l.b16 %v382
        %v521 = vunpack.c.h.b16 %v382
        %v522 = vunpack.c.l.b16 %v383
        %v523 = vunpack.c.h.b16 %v383
        %v524 = vunpack.c.l.b16 %v384
        %v525 = vunpack.c.h.b16 %v384
        %v526 = vunpack.c.l.b16 %v385
        %v527 = vunpack.c.h.b16 %v385
        %v528 = vunpack.c.l.b16 %v386
        %v529 = vunpack.c.h.b16 %v386
        %v530 = vunpack.c.l.b16 %v387
        %v531 = vunpack.c.h.b16 %v387
        %v532 = vunpack.c.l.b16 %v388
        %v533 = vunpack.c.h.b16 %v388
        %v534 = vunpack.c.l.b16 %v389
        %v535 = vunpack.c.h.b16 %v389
        %v536 = vunpack.c.l.b16 %v390
        %v537 = vunpack.c.h.b16 %v390
        %v538 = vunpack.c.l.b16 %v391
        %v539 = vunpack.c.h.b16 %v391
        %v540 = vunpack.c.l.b16 %v392
        %v541 = vunpack.c.h.b16 %v392
        %v542 = vunpack.c.l.b16 %v393
        %v543 = vunpack.c.h.b16 %v393
        %v544 = vunpack.c.l.b16 %v394
        %v545 = vunpack.c.h.b16 %v394
        %v546 = vunpack.c.l.b16 %v395
        %v547 = vunpack.c.h.b16 %v395
        %v548 = vunpack.c.l.b16 %v396
        %v549 = vunpack.c.h.b16 %v396
        %v550 = vunpack.c.l.b16 %v397
        %v551 = vunpack.c.h.b16 %v397
        %v552 = vunpack.c.l.b16 %v398
        %v553 = vunpack.c.h.b16 %v398
        %v554 = vunpack.c.l.b16 %v399
        %v555 = vunpack.c.h.b16 %v399
        %v556 = vpack.c.b16 %v462, %v460
        %v557 = vpack.c.b16 %v463, %v461
        %v558 = vpack.c.b16 %v466, %v464
        %v559 = vpack.c.b16 %v467, %v465
        %v560 = vpack.c.b16 %v470, %v468
        %v561 = vpack.c.b16 %v471, %v469
        %v562 = vpack.c.b16 %v474, %v472
        %v563 = vpack.c.b16 %v475, %v473
        %v564 = vpack.c.b16 %v478, %v476
        %v565 = vpack.c.b16 %v479, %v477
        %v566 = vpack.c.b16 %v482, %v480
        %v567 = vpack.c.b16 %v483, %v481
        %v568 = vpack.c.b16 %v486, %v484
        %v569 = vpack.c.b16 %v487, %v485
        %v570 = vpack.c.b16 %v490, %v488
        %v571 = vpack.c.b16 %v491, %v489
        %v572 = vpack.c.b16 %v494, %v492
        %v573 = vpack.c.b16 %v495, %v493
        %v574 = vpack.c.b16 %v498, %v496
        %v575 = vpack.c.b16 %v499, %v497
        %v576 = vpack.c.b16 %v502, %v500
        %v577 = vpack.c.b16 %v503, %v501
        %v578 = vpack.c.b16 %v506, %v504
        %v579 = vpack.c.b16 %v507, %v505
        %v580 = vpack.c.b16 %v510, %v508
        %v581 = vpack.c.b16 %v511, %v509
        %v582 = vpack.c.b16 %v514, %v512
        %v583 = vpack.c.b16 %v515, %v513
        %v584 = vpack.c.b16 %v518, %v516
        %v585 = vpack.c.b16 %v519, %v517
        %v586 = vpack.c.b16 %v522, %v520
        %v587 = vpack.c.b16 %v523, %v521
        %v588 = vpack.c.b16 %v526, %v524
        %v589 = vpack.c.b16 %v527, %v525
        %v590 = vpack.c.b16 %v530, %v528
        %v591 = vpack.c.b16 %v531, %v529
        %v592 = vpack.c.b16 %v534, %v532
        %v593 = vpack.c.b16 %v535, %v533
        %v594 = vpack.c.b16 %v538, %v536
        %v595 = vpack.c.b16 %v539, %v537
        %v596 = vpack.c.b16 %v542, %v540
        %v597 = vpack.c.b16 %v543, %v541
        %v598 = vpack.c.b16 %v546, %v544
        %v599 = vpack.c.b16 %v547, %v545
        %v600 = vpack.c.b16 %v550, %v548
        %v601 = vpack.c.b16 %v551, %v549
        %v602 = vpack.c.b16 %v554, %v552
        %v603 = vpack.c.b16 %v555, %v553
        %652 = vmatprep.subr.bf16.mxu0 %v557
        %653 = vmatpush1.bf16.msra.mxu0 %v556
        %654 = vmatprep.subr.bf16.mxu0 %v559
        %655 = vmatpush1.bf16.msra.mxu0 %v558
        %656 = vmatprep.subr.bf16.mxu0 %v561
        %657 = vmatpush1.bf16.msra.mxu0 %v560
        %658 = vmatprep.subr.bf16.mxu0 %v563
        %659 = vmatpush1.bf16.msra.mxu0 %v562
        %660 = vmatprep.subr.bf16.mxu0 %v565
        %661 = vmatpush1.bf16.msra.mxu0 %v564
        %662 = vmatprep.subr.bf16.mxu0 %v567
        %663 = vmatpush1.bf16.msra.mxu0 %v566
        %664 = vmatprep.subr.bf16.mxu0 %v569
        %665 = vmatpush1.bf16.msra.mxu0 %v568
        %666 = vmatprep.subr.bf16.mxu0 %v571
        %667 = vmatpush1.bf16.msra.mxu0 %v570
        %668 = vmatprep.subr.bf16.mxu0 %v573
        %669 = vmatpush1.bf16.msra.mxu0 %v572
        %670 = vmatprep.subr.bf16.mxu0 %v575
        %671 = vmatpush1.bf16.msra.mxu0 %v574
        %672 = vmatprep.subr.bf16.mxu0 %v577
        %673 = vmatpush1.bf16.msra.mxu0 %v576
        %674 = vmatprep.subr.bf16.mxu0 %v579
        %675 = vmatpush1.bf16.msra.mxu0 %v578
        %676 = vmatprep.subr.bf16.mxu0 %v581
        %677 = vmatpush1.bf16.msra.mxu0 %v580
        %678 = vmatprep.subr.bf16.mxu0 %v583
        %679 = vmatpush1.bf16.msra.mxu0 %v582
        %680 = vmatprep.subr.bf16.mxu0 %v585
        %681 = vmatpush1.bf16.msra.mxu0 %v584
        %682 = vmatprep.subr.bf16.mxu0 %v587
        %683 = vmatpush1.bf16.msra.mxu0 %v586
        %684 = vmatprep.mubr.bf16.mxu0 %v350
        %685 = vmatmul.mubr.bf16.gmra.mrb[0].mxu0 %v325
        %v686 = vpop.f32.mrb[0].mxu0
        %v687 = vadd.f32 %v405, %v686
        %v688 = vpop.f32.mrb[0].mxu0
        %v689 = vadd.f32 %v409, %v688
        %v690 = vpop.f32.mrb[0].mxu0
        %v691 = vadd.f32 %v405, %v690
        %v692 = vpop.f32.mrb[0].mxu0
        %v693 = vadd.f32 %v409, %v692
        %694 = vdwg.mxu0
        %695 = vmatprep.subr.bf16.mxu0 %v589
        %696 = vmatpush1.bf16.msra.mxu0 %v588
        %697 = vmatprep.subr.bf16.mxu0 %v591
        %698 = vmatpush1.bf16.msra.mxu0 %v590
        %699 = vmatprep.subr.bf16.mxu0 %v593
        %700 = vmatpush1.bf16.msra.mxu0 %v592
        %701 = vmatprep.subr.bf16.mxu0 %v595
        %702 = vmatpush1.bf16.msra.mxu0 %v594
        %703 = vmatprep.subr.bf16.mxu0 %v597
        %704 = vmatpush1.bf16.msra.mxu0 %v596
        %705 = vmatprep.subr.bf16.mxu0 %v599
        %706 = vmatpush1.bf16.msra.mxu0 %v598
        %707 = vmatprep.subr.bf16.mxu0 %v601
        %708 = vmatpush1.bf16.msra.mxu0 %v600
        %709 = vmatprep.subr.bf16.mxu0 %v603
        %710 = vmatpush1.bf16.msra.mxu0 %v602
        %711 = vmatprep.subr.bf16.mxu0 0
        %712 = vmatpush1.bf16.msra.mxu0 0
        %713 = vmatprep.subr.bf16.mxu0 0
        %714 = vmatpush1.bf16.msra.mxu0 0
        %715 = vmatprep.subr.bf16.mxu0 0
        %716 = vmatpush1.bf16.msra.mxu0 0
        %717 = vmatprep.subr.bf16.mxu0 0
        %718 = vmatpush1.bf16.msra.mxu0 0
        %719 = vmatprep.subr.bf16.mxu0 0
        %720 = vmatpush1.bf16.msra.mxu0 0
        %721 = vmatprep.subr.bf16.mxu0 0
        %722 = vmatpush1.bf16.msra.mxu0 0
        %723 = vmatprep.subr.bf16.mxu0 0
        %724 = vmatpush1.bf16.msra.mxu0 0
        %725 = vmatprep.subr.bf16.mxu0 0
        %726 = vmatpush1.bf16.msra.mxu0 0
        %727 = vmatprep.mubr.bf16.mxu0 0
        %728 = vmatmul.mubr.bf16.gmra.mrb[0].mxu0 %v345
        %v729 = vpop.f32.mrb[0].mxu0
        %v730 = vadd.f32 %v687, %v729
        %v731 = vpop.f32.mrb[0].mxu0
        %v732 = vadd.f32 %v689, %v731
        %v733 = vpop.f32.mrb[0].mxu0
        %v734 = vadd.f32 %v691, %v733
        %v735 = vpop.f32.mrb[0].mxu0
        %v736 = vadd.f32 %v693, %v735
        %737 = vdwg.mxu0
        %v738 = vmul.f32 %v730, 0.01
        %v739 = vmul.f32 %v734, 0.01
        %v740 = vmax.f32 %v730, %v738
        %v741 = vmax.f32 %v734, %v739
        %v742 = vrot.slane %v740, 7
        %v743 = vrot.slane %v741, 7
        %v744 = vsel %vm308, %v742, %v743
        %v745 = vsel %vm308, %v743, %v742
        %v746 = vsel %vm321, %v745, 0.0
        %v747 = vsel %vm322, %v744, 0.0
        %v748 = vpack.c.bf16 %v747, %v746
        %v749 = vpack.c.bf16 %v741, %v740
        %v750 = vrot.slane %v740, 1
        %v751 = vrot.slane %v741, 1
        %v752 = vsel %vm328, %v750, %v751
        %v753 = vsel %vm328, %v751, %v750
        %v754 = vsel %vm341, %v752, 0.0
        %v755 = vsel %vm342, %v753, 0.0
        %v756 = vpack.c.bf16 %v755, %v754
        %v757 = vld [vmem:[#allocation7] sm:$0xf]
        %v758 = vld [vmem:[#allocation7 + $0x4] sm:$0xf]
        %v759 = vld [vmem:[#allocation7 + $0x8] sm:$0xf]
        %v760 = vld [vmem:[#allocation7 + $0xc] sm:$0xf]
        %v761 = vld [vmem:[#allocation7 + $0x10] sm:$0xf]
        %v762 = vld [vmem:[#allocation7 + $0x14] sm:$0xf]
        %v763 = vld [vmem:[#allocation7 + $0x18] sm:$0xf]
        %v764 = vld [vmem:[#allocation7 + $0x1c] sm:$0xf]
        %v765 = vld [vmem:[#allocation7 + $0x20] sm:$0xf]
        %v766 = vld [vmem:[#allocation7 + $0x24] sm:$0xf]
        %v767 = vld [vmem:[#allocation7 + $0x28] sm:$0xf]
        %v768 = vld [vmem:[#allocation7 + $0x2c] sm:$0xf]
        %v769 = vld [vmem:[#allocation7 + $0x30] sm:$0xf]
        %v770 = vld [vmem:[#allocation7 + $0x34] sm:$0xf]
        %v771 = vld [vmem:[#allocation7 + $0x38] sm:$0xf]
        %v772 = vld [vmem:[#allocation7 + $0x3c] sm:$0xf]
        %v773 = vld [vmem:[#allocation7 + $0x40] sm:$0xf]
        %v774 = vld [vmem:[#allocation7 + $0x44] sm:$0xf]
        %v775 = vld [vmem:[#allocation7 + $0x48] sm:$0xf]
        %v776 = vld [vmem:[#allocation7 + $0x4c] sm:$0xf]
        %v777 = vld [vmem:[#allocation7 + $0x50] sm:$0xf]
        %v778 = vld [vmem:[#allocation7 + $0x54] sm:$0xf]
        %v779 = vld [vmem:[#allocation7 + $0x58] sm:$0xf]
        %v780 = vld [vmem:[#allocation7 + $0x5c] sm:$0xf]
        %v781 = vld [vmem:[#allocation7 + $0x60] sm:$0xf]
        %v782 = vld [vmem:[#allocation7 + $0x64] sm:$0xf]
        %v783 = vld [vmem:[#allocation7 + $0x68] sm:$0xf]
        %v784 = vld [vmem:[#allocation7 + $0x6c] sm:$0xf]
        %v785 = vld [vmem:[#allocation7 + $0x70] sm:$0xf]
        %v786 = vld [vmem:[#allocation7 + $0x74] sm:$0xf]
        %v787 = vld [vmem:[#allocation7 + $0x78] sm:$0xf]
        %v788 = vld [vmem:[#allocation7 + $0x7c] sm:$0xf]
        %v789 = vld [vmem:[#allocation7 + $0x80] sm:$0xf]
        %v790 = vld [vmem:[#allocation7 + $0x84] sm:$0xf]
        %v791 = vld [vmem:[#allocation7 + $0x88] sm:$0xf]
        %v792 = vld [vmem:[#allocation7 + $0x8c] sm:$0xf]
        %v793 = vld [vmem:[#allocation7 + $0x90] sm:$0xf]
        %v794 = vld [vmem:[#allocation7 + $0x94] sm:$0xf]
        %v795 = vld [vmem:[#allocation7 + $0x98] sm:$0xf]
        %v796 = vld [vmem:[#allocation7 + $0x9c] sm:$0xf]
        %v797 = vld [vmem:[#allocation7 + $0xa0] sm:$0xf]
        %v798 = vld [vmem:[#allocation7 + $0xa4] sm:$0xf]
        %v799 = vld [vmem:[#allocation7 + $0xa8] sm:$0xf]
        %v800 = vld [vmem:[#allocation7 + $0xac] sm:$0xf]
        %v801 = vld [vmem:[#allocation7 + $0xb0] sm:$0xf]
        %v802 = vld [vmem:[#allocation7 + $0xb4] sm:$0xf]
        %v803 = vld [vmem:[#allocation7 + $0xb8] sm:$0xf]
        %v804 = vld [vmem:[#allocation7 + $0xbc] sm:$0xf]
        %v805 = vld [vmem:[%s4] sm:$0x1]
        %v807 = vlaneseq
        %v808 = vshrl.u32 %v807, 7
        %v809 = vsub.s32 0, %v808
        %v810 = vrot.slane %v805, %v809
        %v860 = vunpack.c.l.b16 %v757
        %v861 = vunpack.c.l.b16 %v758
        %v862 = vunpack.c.l.b16 %v759
        %v863 = vunpack.c.l.b16 %v760
        %v864 = vunpack.c.l.b16 %v761
        %v865 = vunpack.c.l.b16 %v762
        %v866 = vunpack.c.l.b16 %v763
        %v867 = vunpack.c.l.b16 %v764
        %v868 = vunpack.c.l.b16 %v765
        %v869 = vunpack.c.l.b16 %v766
        %v870 = vunpack.c.l.b16 %v767
        %v871 = vunpack.c.l.b16 %v768
        %v872 = vunpack.c.l.b16 %v769
        %v873 = vunpack.c.l.b16 %v770
        %v874 = vunpack.c.l.b16 %v771
        %v875 = vunpack.c.l.b16 %v772
        %v876 = vunpack.c.l.b16 %v773
        %v877 = vunpack.c.l.b16 %v774
        %v878 = vunpack.c.l.b16 %v775
        %v879 = vunpack.c.l.b16 %v776
        %v880 = vunpack.c.l.b16 %v777
        %v881 = vunpack.c.l.b16 %v778
        %v882 = vunpack.c.l.b16 %v779
        %v883 = vunpack.c.l.b16 %v780
        %v884 = vunpack.c.l.b16 %v781
        %v885 = vunpack.c.l.b16 %v782
        %v886 = vunpack.c.l.b16 %v783
        %v887 = vunpack.c.l.b16 %v784
        %v888 = vunpack.c.l.b16 %v785
        %v889 = vunpack.c.l.b16 %v786
        %v890 = vunpack.c.l.b16 %v787
        %v891 = vunpack.c.l.b16 %v788
        %v892 = vunpack.c.l.b16 %v789
        %v893 = vunpack.c.l.b16 %v790
        %v894 = vunpack.c.l.b16 %v791
        %v895 = vunpack.c.l.b16 %v792
        %v896 = vunpack.c.l.b16 %v793
        %v897 = vunpack.c.l.b16 %v794
        %v898 = vunpack.c.l.b16 %v795
        %v899 = vunpack.c.l.b16 %v796
        %v900 = vunpack.c.l.b16 %v797
        %v901 = vunpack.c.l.b16 %v798
        %v902 = vunpack.c.l.b16 %v799
        %v903 = vunpack.c.l.b16 %v800
        %v904 = vunpack.c.l.b16 %v801
        %v905 = vunpack.c.l.b16 %v802
        %v906 = vunpack.c.l.b16 %v803
        %v907 = vunpack.c.l.b16 %v804
        %v908 = vpack.c.b16 %v861, %v860
        %v909 = vpack.c.b16 %v863, %v862
        %v910 = vpack.c.b16 %v865, %v864
        %v911 = vpack.c.b16 %v867, %v866
        %v912 = vpack.c.b16 %v869, %v868
        %v913 = vpack.c.b16 %v871, %v870
        %v914 = vpack.c.b16 %v873, %v872
        %v915 = vpack.c.b16 %v875, %v874
        %v916 = vpack.c.b16 %v877, %v876
        %v917 = vpack.c.b16 %v879, %v878
        %v918 = vpack.c.b16 %v881, %v880
        %v919 = vpack.c.b16 %v883, %v882
        %v920 = vpack.c.b16 %v885, %v884
        %v921 = vpack.c.b16 %v887, %v886
        %v922 = vpack.c.b16 %v889, %v888
        %v923 = vpack.c.b16 %v891, %v890
        %v924 = vpack.c.b16 %v893, %v892
        %v925 = vpack.c.b16 %v895, %v894
        %v926 = vpack.c.b16 %v897, %v896
        %v927 = vpack.c.b16 %v899, %v898
        %v928 = vpack.c.b16 %v901, %v900
        %v929 = vpack.c.b16 %v903, %v902
        %v930 = vpack.c.b16 %v905, %v904
        %v931 = vpack.c.b16 %v907, %v906
        %956 = vmatprep.subr.bf16.mxu0 0
        %957 = vmatpush1.bf16.msra.mxu0 %v908
        %958 = vmatprep.subr.bf16.mxu0 0
        %959 = vmatpush1.bf16.msra.mxu0 %v909
        %960 = vmatprep.subr.bf16.mxu0 0
        %961 = vmatpush1.bf16.msra.mxu0 %v910
        %962 = vmatprep.subr.bf16.mxu0 0
        %963 = vmatpush1.bf16.msra.mxu0 %v911
        %964 = vmatprep.subr.bf16.mxu0 0
        %965 = vmatpush1.bf16.msra.mxu0 %v912
        %966 = vmatprep.subr.bf16.mxu0 0
        %967 = vmatpush1.bf16.msra.mxu0 %v913
        %968 = vmatprep.subr.bf16.mxu0 0
        %969 = vmatpush1.bf16.msra.mxu0 %v914
        %970 = vmatprep.subr.bf16.mxu0 0
        %971 = vmatpush1.bf16.msra.mxu0 %v915
        %972 = vmatprep.subr.bf16.mxu0 0
        %973 = vmatpush1.bf16.msra.mxu0 %v916
        %974 = vmatprep.subr.bf16.mxu0 0
        %975 = vmatpush1.bf16.msra.mxu0 %v917
        %976 = vmatprep.subr.bf16.mxu0 0
        %977 = vmatpush1.bf16.msra.mxu0 %v918
        %978 = vmatprep.subr.bf16.mxu0 0
        %979 = vmatpush1.bf16.msra.mxu0 %v919
        %980 = vmatprep.subr.bf16.mxu0 0
        %981 = vmatpush1.bf16.msra.mxu0 %v920
        %982 = vmatprep.subr.bf16.mxu0 0
        %983 = vmatpush1.bf16.msra.mxu0 %v921
        %984 = vmatprep.subr.bf16.mxu0 0
        %985 = vmatpush1.bf16.msra.mxu0 %v922
        %986 = vmatprep.subr.bf16.mxu0 0
        %987 = vmatpush1.bf16.msra.mxu0 %v923
        %988 = vmatprep.mubr.bf16.mxu0 %v749
        %989 = vmatmul.mubr.bf16.gmra.mrb[0].mxu0 %v748
        %v990 = vpop.f32.mrb[0].mxu0
        %v991 = vadd.f32 %v810, %v990
        %v992 = vpop.f32.mrb[0].mxu0
        %v993 = vpop.f32.mrb[0].mxu0
        %v994 = vadd.f32 %v810, %v993
        %v995 = vpop.f32.mrb[0].mxu0
        %996 = vdwg.mxu0
        %997 = vmatprep.subr.bf16.mxu0 0
        %998 = vmatpush1.bf16.msra.mxu0 %v924
        %999 = vmatprep.subr.bf16.mxu0 0
        %1000 = vmatpush1.bf16.msra.mxu0 %v925
        %1001 = vmatprep.subr.bf16.mxu0 0
        %1002 = vmatpush1.bf16.msra.mxu0 %v926
        %1003 = vmatprep.subr.bf16.mxu0 0
        %1004 = vmatpush1.bf16.msra.mxu0 %v927
        %1005 = vmatprep.subr.bf16.mxu0 0
        %1006 = vmatpush1.bf16.msra.mxu0 %v928
        %1007 = vmatprep.subr.bf16.mxu0 0
        %1008 = vmatpush1.bf16.msra.mxu0 %v929
        %1009 = vmatprep.subr.bf16.mxu0 0
        %1010 = vmatpush1.bf16.msra.mxu0 %v930
        %1011 = vmatprep.subr.bf16.mxu0 0
        %1012 = vmatpush1.bf16.msra.mxu0 %v931
        %1013 = vmatprep.subr.bf16.mxu0 0
        %1014 = vmatpush1.bf16.msra.mxu0 0
        %1015 = vmatprep.subr.bf16.mxu0 0
        %1016 = vmatpush1.bf16.msra.mxu0 0
        %1017 = vmatprep.subr.bf16.mxu0 0
        %1018 = vmatpush1.bf16.msra.mxu0 0
        %1019 = vmatprep.subr.bf16.mxu0 0
        %1020 = vmatpush1.bf16.msra.mxu0 0
        %1021 = vmatprep.subr.bf16.mxu0 0
        %1022 = vmatpush1.bf16.msra.mxu0 0
        %1023 = vmatprep.subr.bf16.mxu0 0
        %1024 = vmatpush1.bf16.msra.mxu0 0
        %1025 = vmatprep.subr.bf16.mxu0 0
        %1026 = vmatpush1.bf16.msra.mxu0 0
        %1027 = vmatprep.subr.bf16.mxu0 0
        %1028 = vmatpush1.bf16.msra.mxu0 0
        %1029 = vmatprep.mubr.bf16.mxu0 0
        %1030 = vmatmul.mubr.bf16.gmra.mrb[0].mxu0 %v756
        %v1031 = vpop.f32.mrb[0].mxu0
        %v1032 = vadd.f32 %v991, %v1031
        %v1033 = vpop.f32.mrb[0].mxu0
        %v1034 = vpop.f32.mrb[0].mxu0
        %v1035 = vadd.f32 %v994, %v1034
        %v1036 = vpop.f32.mrb[0].mxu0
        %1037 = vdwg.mxu0
        %v1038 = vadd.f32 %v1032, %v732
        %v1039 = vadd.f32 %v1035, %v736
        %v1040 = vmul.f32 %v1038, 0.01
        %v1041 = vmul.f32 %v1039, 0.01
        %v1042 = vmax.f32 %v1038, %v1040
        %v1043 = vmax.f32 %v1039, %v1041
        %v1044 = vpack.c.bf16 %v1043, %v1042
        %v1046 = vunpack.c.l.b16 %v1044
        %v1047 = vunpack.c.h.b16 %v1044
        %v1048 = vpack.c.b16 %v1046, %v1046
        %v1049 = vpack.c.b16 %v1047, %v1047
        %1052 = vst [vmem:[%s271] sm:$0xf] %v1048
        %1053 = vst [vmem:[%s271 + $0x4] sm:$0xf] %v1049
        %s1054 = sand.u32 %s141, 1
        %s1055 = scalar_lea.sflag [#allocation4], %s1054
        %s1056 = sand.u32 %s141, 1
        %s1057 = smul.addr %s1056, 8
        %s1058 = scalar_lea.vmem [#allocation8], %s1057
        // Predicated region
        $region53: #{tpu_custom_call.1} parent=39 // pred_check
          %p1059 = pneg %p151
        $region54: #{tpu_custom_call.1} parent=39 // pred_check_branch
          %1061 = sbr.rel (%p1059) target = $region56
        $region55: #{tpu_custom_call.1} parent=39 // pred_region
          %s1062 = smul.u32 2, %s23
          %s1064 = ssub.s32 128, 128
          %1065 = vsyncadd %s1055, %s1064
          %s1066 = smul.addr %s1062, 64
          %s1067 = scalar_lea.hbm %s5, %s1066
          %s1068 = sshll.u32 %s1058, 4
          %s1069 = int_to_ptr.vmem [resolvable:$true] %s1068
          %1074 = dma.vmem_to_hbm [thread:$0]  %s1069, 128, %s1067, %s1055, 64, 64, 4
        $region56: #{tpu_custom_call.1} parent=39 // pred_fallthru
          _
      $region40: #{tpu_custom_call.1} parent=5 // pred_fallthru
        _
      %p1075 = scmp.le.s32.totalorder 2, %s18
      // Predicated region
      $region57: #{tpu_custom_call.1} parent=5 // pred_check
        %p1076 = pneg %p1075
      $region58: #{tpu_custom_call.1} parent=5 // pred_check_branch
        %1078 = sbr.rel (%p1076) target = $region60
      $region59: #{tpu_custom_call.1} parent=5 // pred_region
        %s1079 = ssub.s32 %s18, 2
        // Predicated region
        $region61: #{tpu_custom_call.1} parent=59 // pred_check
          %p1080 = pneg %p157
        $region62: #{tpu_custom_call.1} parent=59 // pred_check_branch
          %1082 = sbr.rel (%p1080) target = $region64
        $region63: #{tpu_custom_call.1} parent=59 // pred_region
          %s1083 = sand.u32 %s142, 1
          %s1084 = scalar_lea.sflag [#allocation4], %s1083
          %s1085 = sand.u32 %s142, 1
          %s1086 = smul.addr %s1085, 8
          %s1087 = scalar_lea.vmem [#allocation8], %s1086
          %1088 = dma.done %s1084, 128
        $region64: #{tpu_custom_call.1} parent=59 // pred_fallthru
          _
      $region60: #{tpu_custom_call.1} parent=5 // pred_fallthru
        _
    $region6: #{tpu_custom_call.1} parent=1 // loop_footer
      %s22 = sadd.s32 1, %s18
    $region7: #{tpu_custom_call.1} parent=1 // loop_footer_branch
      %17 = sbr.rel target = $region3
    $region8: #{tpu_custom_call.1} parent=1 // loop_exit
      _
    %1089 = vsyncpa [#allocation3], 1
    %s1090 = scalar_lea.sflag [#allocation3], 1
    %1091 = vsyncpa %s1090, 1
    %1092 = vsyncpa [#allocation6], 1
    %1093 = vsyncpa [#allocation4], 1
    %s1094 = scalar_lea.sflag [#allocation4], 1
    %1095 = vsyncpa %s1094, 1

</llo_original>
